<compile_context>
chip_gen: v7x
topology: tpu7x:2x2x1
jax: 0.10.0
libtpu: 0.0.40
codegen_flags: <defaults>
</compile_context>

<pallas_src>
import functools
from math import sqrt

import numpy as np
import jax
import jax.numpy as jnp
from jax.experimental import pallas as pl
from jax.experimental.pallas import tpu as pltpu


# ---------------------------------------------------------------------------
# Fused kernel: per-(batch, head) projections + attention + mix MLP + context
# + folded output projection (accumulated over heads into the output block).
# ---------------------------------------------------------------------------
def _mhad_fused_kernel(xq_ref, xk_ref, xv_ref, d_ref,
                       wq_ref, bq_ref, wk_ref, bk_ref, wv_ref, bv_ref,
                       wo_ref, bo_ref,
                       w1_ref, b1_ref, w2_ref, b2_ref, w3_ref, b3_ref,
                       o_ref, mixed_s, *, scale, S):
    hh = pl.program_id(1)            # head index (inner, "arbitrary" axis)

    xq = xq_ref[...]                 # (S, E)
    xk = xk_ref[...]
    xv = xv_ref[...]
    dist = d_ref[...]                # (S, S)

    # --- per-head q/k/v projections, computed in VMEM ---
    q = jnp.dot(xq, wq_ref[hh], preferred_element_type=jnp.float32) + bq_ref[hh]  # (S, dk)
    k = jnp.dot(xk, wk_ref[hh], preferred_element_type=jnp.float32) + bk_ref[hh]
    v = jnp.dot(xv, wv_ref[hh], preferred_element_type=jnp.float32) + bv_ref[hh]

    # --- attention scores + softmax (approx reciprocal -> EUP slot) ---
    s = jax.lax.dot_general(q, k, (((1,), (1,)), ((), ())),
                            preferred_element_type=jnp.float32) * scale           # (S, S)
    s = s - jnp.max(s, axis=-1, keepdims=True)
    e = jnp.exp(s)
    attn = e * pl.reciprocal(jnp.sum(e, axis=-1, keepdims=True), approx=True)     # (S, S)

    # --- per-head distance-mix MLP: Lin(2,H)-ReLU-Lin(H,H)-ReLU-Lin(H,1) ---
    # Key dim stays on lanes, hidden units on sublanes (column form of the
    # torch math), so intermediates are (H, S) instead of lane-sparse (N, 1).
    w1 = w1_ref[hh]                  # (H, 2) torch layout
    b1 = b1_ref[hh]                  # (H, 1)
    w2 = w2_ref[hh]                  # (H, H) torch layout
    b2 = b2_ref[hh]                  # (H, 1)
    w3 = w3_ref[hh]                  # (H, 1) = W3^T
    b3 = b3_ref[hh]                  # (1, 1)
    for i in range(S):               # static unroll over query rows (S small)
        a_i = attn[i:i + 1, :]       # (1, S)
        d_i = dist[i:i + 1, :]       # (1, S)
        h1 = jnp.maximum(w1[:, 0:1] * a_i + w1[:, 1:2] * d_i + b1, 0.0)            # (H, S)
        h2 = jnp.maximum(
            jnp.dot(w2, h1, preferred_element_type=jnp.float32) + b2, 0.0)         # (H, S)
        mixed_s[i:i + 1, :] = jnp.sum(h2 * w3, axis=0, keepdims=True) + b3          # (1, S)
    mixed = mixed_s[...]             # (S, S)

    # --- context for this head, folded into the output projection ---
    ctx = jnp.dot(mixed, v, preferred_element_type=jnp.float32)                    # (S, dk)
    contrib = jnp.dot(ctx, wo_ref[hh], preferred_element_type=jnp.float32)         # (S, E)

    @pl.when(hh == 0)
    def _():
        o_ref[...] = jnp.broadcast_to(bo_ref[...], o_ref.shape)
    o_ref[...] += contrib


# ---------------------------------------------------------------------------
# Wrapper: full MHAD_Layer_ forward as one pallas_call
# ---------------------------------------------------------------------------
def mhad_forward(params, query, key_in, value, dist_mat):
    B, S, E = query.shape
    nh = params["num_heads"]
    dk = E // nh
    H = params["dist_hidden_dim"]

    def batch_spec(*tail):   # (B, ...) arrays: batch slice, constant across heads
        return pl.BlockSpec((None,) + tail, lambda b, n: (b,) + (0,) * len(tail))

    def full_spec(shape):    # whole (tiny) array resident in VMEM, never re-DMA'd
        return pl.BlockSpec(shape, lambda *_: (0,) * len(shape))

    kernel = functools.partial(_mhad_fused_kernel, scale=1.0 / sqrt(dk), S=S)

    return pl.pallas_call(
        kernel,
        out_shape=jax.ShapeDtypeStruct((B, S, E), jnp.float32),
        grid=(B, nh),
        in_specs=[
            batch_spec(S, E),                                  # query
            batch_spec(S, E),                                  # key
            batch_spec(S, E),                                  # value
            batch_spec(S, S),                                  # dist
            full_spec((nh, E, dk)), full_spec((nh, 1, dk)),    # Wq^T head slices, bq
            full_spec((nh, E, dk)), full_spec((nh, 1, dk)),    # Wk^T head slices, bk
            full_spec((nh, E, dk)), full_spec((nh, 1, dk)),    # Wv^T head slices, bv
            full_spec((nh, dk, E)), full_spec((1, E)),         # Wo^T head slices, bo
            full_spec((nh, H, 2)), full_spec((nh, H, 1)),      # mix layer 1
            full_spec((nh, H, H)), full_spec((nh, H, 1)),      # mix layer 2
            full_spec((nh, H, 1)), full_spec((nh, 1, 1)),      # mix layer 3
        ],
        out_specs=pl.BlockSpec((None, S, E), lambda b, n: (b, 0, 0)),
        scratch_shapes=[pltpu.VMEM((S, S), jnp.float32)],
        compiler_params=pltpu.CompilerParams(
            dimension_semantics=("parallel", "arbitrary")),
    )(query, key_in, value, dist_mat,
      params["wq"], params["bq"], params["wk"], params["bk"],
      params["wv"], params["bv"], params["wo"], params["bo"],
      params["mix_w1"], params["mix_b1"], params["mix_w2"], params["mix_b2"],
      params["mix_w3"], params["mix_b3"])


# ---------------------------------------------------------------------------
# Deterministic parameter init (torch-equivalent shapes, pre-arranged per head
# once so no w.T / transpose relayouts happen per forward call)
# ---------------------------------------------------------------------------
def init_params(key, embed_dim, num_heads, dist_hidden_dim):
    E, H = embed_dim, dist_hidden_dim
    dk = E // num_heads
    ks = jax.random.split(key, 4 + 3 * num_heads)

    def lin_init(k, fan_out, fan_in):
        kw, kb = jax.random.split(k)
        bound = 1.0 / sqrt(fan_in)
        w = jax.random.uniform(kw, (fan_out, fan_in), jnp.float32, -bound, bound)
        b = jax.random.uniform(kb, (fan_out,), jnp.float32, -bound, bound)
        return w, b

    wq, bq = lin_init(ks[0], E, E)     # torch layout (E_out, E_in)
    wk, bk = lin_init(ks[1], E, E)
    wv, bv = lin_init(ks[2], E, E)
    wo, bo = lin_init(ks[3], E, E)

    def per_head_in(w, b):
        # y = x @ w.T + b ; head h owns output columns [h*dk, (h+1)*dk)
        wt = w.T.reshape(E, num_heads, dk).transpose(1, 0, 2)   # (nh, E, dk)
        return wt, b.reshape(num_heads, 1, dk)

    wq_h, bq_h = per_head_in(wq, bq)
    wk_h, bk_h = per_head_in(wk, bk)
    wv_h, bv_h = per_head_in(wv, bv)
    wo_h = wo.T.reshape(num_heads, dk, E)        # rows h*dk:(h+1)*dk of Wo^T
    bo_r = bo.reshape(1, E)

    w1s, b1s, w2s, b2s, w3s, b3s = [], [], [], [], [], []
    for i in range(num_heads):
        w1, b1 = lin_init(ks[4 + 3 * i], H, 2)   # torch (H, 2)
        w2, b2 = lin_init(ks[5 + 3 * i], H, H)   # torch (H, H)
        w3, b3 = lin_init(ks[6 + 3 * i], 1, H)   # torch (1, H)
        w1s.append(w1)
        b1s.append(b1[:, None])                  # (H, 1)
        w2s.append(w2)
        b2s.append(b2[:, None])                  # (H, 1)
        w3s.append(w3.T)                         # (H, 1)
        b3s.append(b3[:, None])                  # (1, 1)

    return dict(
        num_heads=num_heads, dist_hidden_dim=H,
        wq=wq_h, bq=bq_h, wk=wk_h, bk=bk_h, wv=wv_h, bv=bv_h,
        wo=wo_h, bo=bo_r,
        mix_w1=jnp.stack(w1s), mix_b1=jnp.stack(b1s),
        mix_w2=jnp.stack(w2s), mix_b2=jnp.stack(b2s),
        mix_w3=jnp.stack(w3s), mix_b3=jnp.stack(b3s),
    )


# ---------------------------------------------------------------------------
# Pure-JAX reference (for numerical verification)
# ---------------------------------------------------------------------------
def mhad_reference(params, query, key_in, value, dist_mat):
    B, S, E = query.shape
    nh = params["num_heads"]
    dk = E // nh

    def proj(x, w_h, b_h):
        return jnp.einsum("bse,hed->bhsd", x, w_h) + b_h[None]   # (B, nh, S, dk)

    q = proj(query, params["wq"], params["bq"])
    k = proj(key_in, params["wk"], params["bk"])
    v = proj(value, params["wv"], params["bv"])

    scores = jnp.einsum("bhqd,bhkd->bhqk", q, k) / sqrt(dk)
    attn = jax.nn.softmax(scores, axis=-1)

    heads = []
    for i in range(nh):
        a = attn[:, i]                                   # (B, S, S)
        x2 = jnp.stack([a, dist_mat], axis=-1)           # (B, S, S, 2)
        w1 = params["mix_w1"][i]                         # (H, 2)
        b1 = params["mix_b1"][i][:, 0]
        w2 = params["mix_w2"][i]                         # (H, H)
        b2 = params["mix_b2"][i][:, 0]
        w3 = params["mix_w3"][i][:, 0]                   # (H,)
        b3 = params["mix_b3"][i][0, 0]
        h1 = jax.nn.relu(x2 @ w1.T + b1)
        h2 = jax.nn.relu(h1 @ w2.T + b2)
        heads.append(h2 @ w3 + b3)                       # (B, S, S)
    mixed = jnp.stack(heads, axis=1)                     # (B, nh, S, S)

    ctx = jnp.einsum("bhqk,bhkd->bhqd", mixed, v)        # (B, nh, S, dk)
    return jnp.einsum("bhqd,hde->bqe", ctx, params["wo"]) + params["bo"][0]


if __name__ == "__main__":
    B, S, E, num_heads, H = 2, 8, 32, 4, 16              # d_k = 8

    root = jax.random.PRNGKey(0)
    kq, kk, kv, kd, kp = jax.random.split(root, 5)
    query = jax.random.normal(kq, (B, S, E), jnp.float32)
    key_in = jax.random.normal(kk, (B, S, E), jnp.float32)
    value = jax.random.normal(kv, (B, S, E), jnp.float32)
    dist_mat = jax.random.normal(kd, (B, S, S), jnp.float32)

    params = init_params(kp, E, num_heads, H)

    out = jax.block_until_ready(mhad_forward(params, query, key_in, value, dist_mat))
    ref = mhad_reference(params, query, key_in, value, dist_mat)
    np.testing.assert_allclose(np.asarray(out), np.asarray(ref), rtol=2e-3, atol=2e-3)

    print("KERNEL_OK")
</pallas_src>

<mosaic_0001>
module attributes {stable_mosaic.version = 11 : i64} {
  func.func @_mhad_fused_kernel(%arg0: i32, %arg1: i32, %arg2: memref<1x8x32xf32, #tpu.memory_space<vmem>>, %arg3: memref<1x8x32xf32, #tpu.memory_space<vmem>>, %arg4: memref<1x8x32xf32, #tpu.memory_space<vmem>>, %arg5: memref<1x8x8xf32, #tpu.memory_space<vmem>>, %arg6: memref<4x32x8xf32, #tpu.memory_space<vmem>>, %arg7: memref<4x1x8xf32, #tpu.memory_space<vmem>>, %arg8: memref<4x32x8xf32, #tpu.memory_space<vmem>>, %arg9: memref<4x1x8xf32, #tpu.memory_space<vmem>>, %arg10: memref<4x32x8xf32, #tpu.memory_space<vmem>>, %arg11: memref<4x1x8xf32, #tpu.memory_space<vmem>>, %arg12: memref<4x8x32xf32, #tpu.memory_space<vmem>>, %arg13: memref<1x32xf32, #tpu.memory_space<vmem>>, %arg14: memref<4x16x2xf32, #tpu.memory_space<vmem>>, %arg15: memref<4x16x1xf32, #tpu.memory_space<vmem>>, %arg16: memref<4x16x16xf32, #tpu.memory_space<vmem>>, %arg17: memref<4x16x1xf32, #tpu.memory_space<vmem>>, %arg18: memref<4x16x1xf32, #tpu.memory_space<vmem>>, %arg19: memref<4x1x1xf32, #tpu.memory_space<vmem>>, %arg20: memref<1x8x32xf32, #tpu.memory_space<vmem>>, %arg21: memref<8x8xf32, #tpu.memory_space<vmem>>) attributes {dimension_semantics = [#tpu.dimension_semantics<parallel>, #tpu.dimension_semantics<arbitrary>], iteration_bounds = array<i64: 2, 4>, scalar_prefetch = 0 : i64, scratch_operands = 1 : i64, tpu.core_type = #tpu.core_type<tc>, window_params = [{transform_indices = @transform_0, window_bounds = array<i64: 1, 8, 32>}, {transform_indices = @transform_1, window_bounds = array<i64: 1, 8, 32>}, {transform_indices = @transform_2, window_bounds = array<i64: 1, 8, 32>}, {transform_indices = @transform_3, window_bounds = array<i64: 1, 8, 8>}, {pipeline_mode = #tpu.pipeline_mode<synchronous>, transform_indices = @transform_4, window_bounds = array<i64: 4, 32, 8>}, {pipeline_mode = #tpu.pipeline_mode<synchronous>, transform_indices = @transform_5, window_bounds = array<i64: 4, 1, 8>}, {pipeline_mode = #tpu.pipeline_mode<synchronous>, transform_indices = @transform_6, window_bounds = array<i64: 4, 32, 8>}, {pipeline_mode = #tpu.pipeline_mode<synchronous>, transform_indices = @transform_7, window_bounds = array<i64: 4, 1, 8>}, {pipeline_mode = #tpu.pipeline_mode<synchronous>, transform_indices = @transform_8, window_bounds = array<i64: 4, 32, 8>}, {pipeline_mode = #tpu.pipeline_mode<synchronous>, transform_indices = @transform_9, window_bounds = array<i64: 4, 1, 8>}, {pipeline_mode = #tpu.pipeline_mode<synchronous>, transform_indices = @transform_10, window_bounds = array<i64: 4, 8, 32>}, {pipeline_mode = #tpu.pipeline_mode<synchronous>, transform_indices = @transform_11, window_bounds = array<i64: 1, 32>}, {pipeline_mode = #tpu.pipeline_mode<synchronous>, transform_indices = @transform_12, window_bounds = array<i64: 4, 16, 2>}, {pipeline_mode = #tpu.pipeline_mode<synchronous>, transform_indices = @transform_13, window_bounds = array<i64: 4, 16, 1>}, {pipeline_mode = #tpu.pipeline_mode<synchronous>, transform_indices = @transform_14, window_bounds = array<i64: 4, 16, 16>}, {pipeline_mode = #tpu.pipeline_mode<synchronous>, transform_indices = @transform_15, window_bounds = array<i64: 4, 16, 1>}, {pipeline_mode = #tpu.pipeline_mode<synchronous>, transform_indices = @transform_16, window_bounds = array<i64: 4, 16, 1>}, {pipeline_mode = #tpu.pipeline_mode<synchronous>, transform_indices = @transform_17, window_bounds = array<i64: 4, 1, 1>}, {transform_indices = @transform_18, window_bounds = array<i64: 1, 8, 32>}]} {
    %c0 = arith.constant 0 : index
    %c0_0 = arith.constant 0 : index
    %c0_1 = arith.constant 0 : index
    %0 = vector.load %arg2[%c0, %c0_0, %c0_1] : memref<1x8x32xf32, #tpu.memory_space<vmem>>, vector<1x8x32xf32>
    %1 = vector.shape_cast %0 : vector<1x8x32xf32> to vector<8x32xf32>
    %c0_2 = arith.constant 0 : index
    %c0_3 = arith.constant 0 : index
    %c0_4 = arith.constant 0 : index
    %2 = vector.load %arg3[%c0_2, %c0_3, %c0_4] : memref<1x8x32xf32, #tpu.memory_space<vmem>>, vector<1x8x32xf32>
    %3 = vector.shape_cast %2 : vector<1x8x32xf32> to vector<8x32xf32>
    %c0_5 = arith.constant 0 : index
    %c0_6 = arith.constant 0 : index
    %c0_7 = arith.constant 0 : index
    %4 = vector.load %arg4[%c0_5, %c0_6, %c0_7] : memref<1x8x32xf32, #tpu.memory_space<vmem>>, vector<1x8x32xf32>
    %5 = vector.shape_cast %4 : vector<1x8x32xf32> to vector<8x32xf32>
    %c0_8 = arith.constant 0 : index
    %c0_9 = arith.constant 0 : index
    %c0_10 = arith.constant 0 : index
    %6 = vector.load %arg5[%c0_8, %c0_9, %c0_10] : memref<1x8x8xf32, #tpu.memory_space<vmem>>, vector<1x8x8xf32>
    %7 = vector.shape_cast %6 : vector<1x8x8xf32> to vector<8x8xf32>
    %8 = arith.index_cast %arg1 : i32 to index
    %c0_11 = arith.constant 0 : index
    %c0_12 = arith.constant 0 : index
    %9 = vector.load %arg6[%8, %c0_11, %c0_12] : memref<4x32x8xf32, #tpu.memory_space<vmem>>, vector<1x32x8xf32>
    %10 = vector.shape_cast %9 : vector<1x32x8xf32> to vector<32x8xf32>
    %cst = arith.constant dense<0.000000e+00> : vector<8x8xf32>
    %11 = tpu.matmul %1, %10, %cst {dimension_numbers = #tpu.dot_dimension_numbers<[1], [0], [0], [1], [0, 0, 1, 1], [], []>} : vector<8x32xf32>, vector<32x8xf32>, vector<8x8xf32> -> vector<8x8xf32>
    %12 = arith.index_cast %arg1 : i32 to index
    %c0_13 = arith.constant 0 : index
    %c0_14 = arith.constant 0 : index
    %13 = vector.load %arg7[%12, %c0_13, %c0_14] : memref<4x1x8xf32, #tpu.memory_space<vmem>>, vector<1x1x8xf32>
    %14 = vector.shape_cast %13 : vector<1x1x8xf32> to vector<1x8xf32>
    %15 = vector.broadcast %14 : vector<1x8xf32> to vector<8x8xf32>
    %16 = arith.addf %11, %15 : vector<8x8xf32>
    %17 = arith.index_cast %arg1 : i32 to index
    %c0_15 = arith.constant 0 : index
    %c0_16 = arith.constant 0 : index
    %18 = vector.load %arg8[%17, %c0_15, %c0_16] : memref<4x32x8xf32, #tpu.memory_space<vmem>>, vector<1x32x8xf32>
    %19 = vector.shape_cast %18 : vector<1x32x8xf32> to vector<32x8xf32>
    %cst_17 = arith.constant dense<0.000000e+00> : vector<8x8xf32>
    %20 = tpu.matmul %3, %19, %cst_17 {dimension_numbers = #tpu.dot_dimension_numbers<[1], [0], [0], [1], [0, 0, 1, 1], [], []>} : vector<8x32xf32>, vector<32x8xf32>, vector<8x8xf32> -> vector<8x8xf32>
    %21 = arith.index_cast %arg1 : i32 to index
    %c0_18 = arith.constant 0 : index
    %c0_19 = arith.constant 0 : index
    %22 = vector.load %arg9[%21, %c0_18, %c0_19] : memref<4x1x8xf32, #tpu.memory_space<vmem>>, vector<1x1x8xf32>
    %23 = vector.shape_cast %22 : vector<1x1x8xf32> to vector<1x8xf32>
    %24 = vector.broadcast %23 : vector<1x8xf32> to vector<8x8xf32>
    %25 = arith.addf %20, %24 : vector<8x8xf32>
    %26 = arith.index_cast %arg1 : i32 to index
    %c0_20 = arith.constant 0 : index
    %c0_21 = arith.constant 0 : index
    %27 = vector.load %arg10[%26, %c0_20, %c0_21] : memref<4x32x8xf32, #tpu.memory_space<vmem>>, vector<1x32x8xf32>
    %28 = vector.shape_cast %27 : vector<1x32x8xf32> to vector<32x8xf32>
    %cst_22 = arith.constant dense<0.000000e+00> : vector<8x8xf32>
    %29 = tpu.matmul %5, %28, %cst_22 {dimension_numbers = #tpu.dot_dimension_numbers<[1], [0], [0], [1], [0, 0, 1, 1], [], []>} : vector<8x32xf32>, vector<32x8xf32>, vector<8x8xf32> -> vector<8x8xf32>
    %30 = arith.index_cast %arg1 : i32 to index
    %c0_23 = arith.constant 0 : index
    %c0_24 = arith.constant 0 : index
    %31 = vector.load %arg11[%30, %c0_23, %c0_24] : memref<4x1x8xf32, #tpu.memory_space<vmem>>, vector<1x1x8xf32>
    %32 = vector.shape_cast %31 : vector<1x1x8xf32> to vector<1x8xf32>
    %33 = vector.broadcast %32 : vector<1x8xf32> to vector<8x8xf32>
    %34 = arith.addf %29, %33 : vector<8x8xf32>
    %cst_25 = arith.constant dense<0.000000e+00> : vector<8x8xf32>
    %35 = tpu.matmul %16, %25, %cst_25 {dimension_numbers = #tpu.dot_dimension_numbers<[1], [1], [0], [0], [0, 0, 1, 0], [], []>} : vector<8x8xf32>, vector<8x8xf32>, vector<8x8xf32> -> vector<8x8xf32>
    %cst_26 = arith.constant 0.353553385 : f32
    %36 = vector.broadcast %cst_26 : f32 to vector<8x8xf32>
    %37 = arith.mulf %35, %36 : vector<8x8xf32>
    %cst_27 = arith.constant dense<0xFF800000> : vector<8xf32>
    %38 = vector.multi_reduction <maximumf>, %37, %cst_27 [1] : vector<8x8xf32> to vector<8xf32>
    %39 = vector.shape_cast %38 : vector<8xf32> to vector<8x1xf32>
    %40 = vector.broadcast %39 : vector<8x1xf32> to vector<8x8xf32>
    %41 = arith.subf %37, %40 : vector<8x8xf32>
    %42 = math.exp %41 : vector<8x8xf32>
    %cst_28 = arith.constant dense<0.000000e+00> : vector<8xf32>
    %43 = vector.multi_reduction <add>, %42, %cst_28 [1] : vector<8x8xf32> to vector<8xf32>
    %44 = vector.shape_cast %43 : vector<8xf32> to vector<8x1xf32>
    %45 = tpu.reciprocal %44 {approx = true} : vector<8x1xf32> -> vector<8x1xf32>
    %46 = vector.broadcast %45 : vector<8x1xf32> to vector<8x8xf32>
    %47 = arith.mulf %42, %46 : vector<8x8xf32>
    %48 = arith.index_cast %arg1 : i32 to index
    %c0_29 = arith.constant 0 : index
    %c0_30 = arith.constant 0 : index
    %49 = vector.load %arg14[%48, %c0_29, %c0_30] : memref<4x16x2xf32, #tpu.memory_space<vmem>>, vector<1x16x2xf32>
    %50 = vector.shape_cast %49 : vector<1x16x2xf32> to vector<16x2xf32>
    %51 = arith.index_cast %arg1 : i32 to index
    %c0_31 = arith.constant 0 : index
    %c0_32 = arith.constant 0 : index
    %52 = vector.load %arg15[%51, %c0_31, %c0_32] : memref<4x16x1xf32, #tpu.memory_space<vmem>>, vector<1x16x1xf32>
    %53 = vector.shape_cast %52 : vector<1x16x1xf32> to vector<16x1xf32>
    %54 = arith.index_cast %arg1 : i32 to index
    %c0_33 = arith.constant 0 : index
    %c0_34 = arith.constant 0 : index
    %55 = vector.load %arg16[%54, %c0_33, %c0_34] : memref<4x16x16xf32, #tpu.memory_space<vmem>>, vector<1x16x16xf32>
    %56 = vector.shape_cast %55 : vector<1x16x16xf32> to vector<16x16xf32>
    %57 = arith.index_cast %arg1 : i32 to index
    %c0_35 = arith.constant 0 : index
    %c0_36 = arith.constant 0 : index
    %58 = vector.load %arg17[%57, %c0_35, %c0_36] : memref<4x16x1xf32, #tpu.memory_space<vmem>>, vector<1x16x1xf32>
    %59 = vector.shape_cast %58 : vector<1x16x1xf32> to vector<16x1xf32>
    %60 = arith.index_cast %arg1 : i32 to index
    %c0_37 = arith.constant 0 : index
    %c0_38 = arith.constant 0 : index
    %61 = vector.load %arg18[%60, %c0_37, %c0_38] : memref<4x16x1xf32, #tpu.memory_space<vmem>>, vector<1x16x1xf32>
    %62 = vector.shape_cast %61 : vector<1x16x1xf32> to vector<16x1xf32>
    %63 = arith.index_cast %arg1 : i32 to index
    %c0_39 = arith.constant 0 : index
    %c0_40 = arith.constant 0 : index
    %64 = vector.load %arg19[%63, %c0_39, %c0_40] : memref<4x1x1xf32, #tpu.memory_space<vmem>>, vector<1x1x1xf32>
    %65 = vector.shape_cast %64 : vector<1x1x1xf32> to vector<1x1xf32>
    %66 = vector.extract_strided_slice %47 {offsets = [0, 0], sizes = [1, 8], strides = [1, 1]} : vector<8x8xf32> to vector<1x8xf32>
    %67 = vector.extract_strided_slice %7 {offsets = [0, 0], sizes = [1, 8], strides = [1, 1]} : vector<8x8xf32> to vector<1x8xf32>
    %68 = vector.extract_strided_slice %50 {offsets = [0, 0], sizes = [16, 1], strides = [1, 1]} : vector<16x2xf32> to vector<16x1xf32>
    %69 = vector.broadcast %68 : vector<16x1xf32> to vector<16x8xf32>
    %70 = vector.broadcast %66 : vector<1x8xf32> to vector<16x8xf32>
    %71 = arith.mulf %69, %70 : vector<16x8xf32>
    %72 = vector.extract_strided_slice %50 {offsets = [0, 1], sizes = [16, 1], strides = [1, 1]} : vector<16x2xf32> to vector<16x1xf32>
    %73 = vector.broadcast %72 : vector<16x1xf32> to vector<16x8xf32>
    %74 = vector.broadcast %67 : vector<1x8xf32> to vector<16x8xf32>
    %75 = arith.mulf %73, %74 : vector<16x8xf32>
    %76 = arith.addf %71, %75 : vector<16x8xf32>
    %77 = vector.broadcast %53 : vector<16x1xf32> to vector<16x8xf32>
    %78 = arith.addf %76, %77 : vector<16x8xf32>
    %cst_41 = arith.constant 0.000000e+00 : f32
    %79 = vector.broadcast %cst_41 : f32 to vector<16x8xf32>
    %80 = arith.maximumf %78, %79 : vector<16x8xf32>
    %cst_42 = arith.constant dense<0.000000e+00> : vector<16x8xf32>
    %81 = tpu.matmul %56, %80, %cst_42 {dimension_numbers = #tpu.dot_dimension_numbers<[1], [0], [0], [1], [0, 0, 1, 1], [], []>} : vector<16x16xf32>, vector<16x8xf32>, vector<16x8xf32> -> vector<16x8xf32>
    %82 = vector.broadcast %59 : vector<16x1xf32> to vector<16x8xf32>
    %83 = arith.addf %81, %82 : vector<16x8xf32>
    %cst_43 = arith.constant 0.000000e+00 : f32
    %84 = vector.broadcast %cst_43 : f32 to vector<16x8xf32>
    %85 = arith.maximumf %83, %84 : vector<16x8xf32>
    %86 = vector.broadcast %62 : vector<16x1xf32> to vector<16x8xf32>
    %87 = arith.mulf %85, %86 : vector<16x8xf32>
    %cst_44 = arith.constant dense<0.000000e+00> : vector<8xf32>
    %88 = vector.multi_reduction <add>, %87, %cst_44 [0] : vector<16x8xf32> to vector<8xf32>
    %89 = vector.shape_cast %88 : vector<8xf32> to vector<1x8xf32>
    %90 = vector.broadcast %65 : vector<1x1xf32> to vector<1x8xf32>
    %91 = arith.addf %89, %90 : vector<1x8xf32>
    %c0_45 = arith.constant 0 : index
    %c0_46 = arith.constant 0 : index
    %92 = vector.load %arg21[%c0_45, %c0_46] : memref<8x8xf32, #tpu.memory_space<vmem>>, vector<1x8xf32>
    tpu.vector_store %arg21[%c0_45, %c0_46], %91 {strides = array<i32>} : memref<8x8xf32, #tpu.memory_space<vmem>>, vector<1x8xf32>,
    %93 = vector.extract_strided_slice %47 {offsets = [1, 0], sizes = [1, 8], strides = [1, 1]} : vector<8x8xf32> to vector<1x8xf32>
    %94 = vector.extract_strided_slice %7 {offsets = [1, 0], sizes = [1, 8], strides = [1, 1]} : vector<8x8xf32> to vector<1x8xf32>
    %95 = vector.extract_strided_slice %50 {offsets = [0, 0], sizes = [16, 1], strides = [1, 1]} : vector<16x2xf32> to vector<16x1xf32>
    %96 = vector.broadcast %95 : vector<16x1xf32> to vector<16x8xf32>
    %97 = vector.broadcast %93 : vector<1x8xf32> to vector<16x8xf32>
    %98 = arith.mulf %96, %97 : vector<16x8xf32>
    %99 = vector.extract_strided_slice %50 {offsets = [0, 1], sizes = [16, 1], strides = [1, 1]} : vector<16x2xf32> to vector<16x1xf32>
    %100 = vector.broadcast %99 : vector<16x1xf32> to vector<16x8xf32>
    %101 = vector.broadcast %94 : vector<1x8xf32> to vector<16x8xf32>
    %102 = arith.mulf %100, %101 : vector<16x8xf32>
    %103 = arith.addf %98, %102 : vector<16x8xf32>
    %104 = vector.broadcast %53 : vector<16x1xf32> to vector<16x8xf32>
    %105 = arith.addf %103, %104 : vector<16x8xf32>
    %cst_47 = arith.constant 0.000000e+00 : f32
    %106 = vector.broadcast %cst_47 : f32 to vector<16x8xf32>
    %107 = arith.maximumf %105, %106 : vector<16x8xf32>
    %cst_48 = arith.constant dense<0.000000e+00> : vector<16x8xf32>
    %108 = tpu.matmul %56, %107, %cst_48 {dimension_numbers = #tpu.dot_dimension_numbers<[1], [0], [0], [1], [0, 0, 1, 1], [], []>} : vector<16x16xf32>, vector<16x8xf32>, vector<16x8xf32> -> vector<16x8xf32>
    %109 = vector.broadcast %59 : vector<16x1xf32> to vector<16x8xf32>
    %110 = arith.addf %108, %109 : vector<16x8xf32>
    %cst_49 = arith.constant 0.000000e+00 : f32
    %111 = vector.broadcast %cst_49 : f32 to vector<16x8xf32>
    %112 = arith.maximumf %110, %111 : vector<16x8xf32>
    %113 = vector.broadcast %62 : vector<16x1xf32> to vector<16x8xf32>
    %114 = arith.mulf %112, %113 : vector<16x8xf32>
    %cst_50 = arith.constant dense<0.000000e+00> : vector<8xf32>
    %115 = vector.multi_reduction <add>, %114, %cst_50 [0] : vector<16x8xf32> to vector<8xf32>
    %116 = vector.shape_cast %115 : vector<8xf32> to vector<1x8xf32>
    %117 = vector.broadcast %65 : vector<1x1xf32> to vector<1x8xf32>
    %118 = arith.addf %116, %117 : vector<1x8xf32>
    %c1 = arith.constant 1 : index
    %c0_51 = arith.constant 0 : index
    %119 = vector.load %arg21[%c1, %c0_51] : memref<8x8xf32, #tpu.memory_space<vmem>>, vector<1x8xf32>
    tpu.vector_store %arg21[%c1, %c0_51], %118 {strides = array<i32>} : memref<8x8xf32, #tpu.memory_space<vmem>>, vector<1x8xf32>,
    %120 = vector.extract_strided_slice %47 {offsets = [2, 0], sizes = [1, 8], strides = [1, 1]} : vector<8x8xf32> to vector<1x8xf32>
    %121 = vector.extract_strided_slice %7 {offsets = [2, 0], sizes = [1, 8], strides = [1, 1]} : vector<8x8xf32> to vector<1x8xf32>
    %122 = vector.extract_strided_slice %50 {offsets = [0, 0], sizes = [16, 1], strides = [1, 1]} : vector<16x2xf32> to vector<16x1xf32>
    %123 = vector.broadcast %122 : vector<16x1xf32> to vector<16x8xf32>
    %124 = vector.broadcast %120 : vector<1x8xf32> to vector<16x8xf32>
    %125 = arith.mulf %123, %124 : vector<16x8xf32>
    %126 = vector.extract_strided_slice %50 {offsets = [0, 1], sizes = [16, 1], strides = [1, 1]} : vector<16x2xf32> to vector<16x1xf32>
    %127 = vector.broadcast %126 : vector<16x1xf32> to vector<16x8xf32>
    %128 = vector.broadcast %121 : vector<1x8xf32> to vector<16x8xf32>
    %129 = arith.mulf %127, %128 : vector<16x8xf32>
    %130 = arith.addf %125, %129 : vector<16x8xf32>
    %131 = vector.broadcast %53 : vector<16x1xf32> to vector<16x8xf32>
    %132 = arith.addf %130, %131 : vector<16x8xf32>
    %cst_52 = arith.constant 0.000000e+00 : f32
    %133 = vector.broadcast %cst_52 : f32 to vector<16x8xf32>
    %134 = arith.maximumf %132, %133 : vector<16x8xf32>
    %cst_53 = arith.constant dense<0.000000e+00> : vector<16x8xf32>
    %135 = tpu.matmul %56, %134, %cst_53 {dimension_numbers = #tpu.dot_dimension_numbers<[1], [0], [0], [1], [0, 0, 1, 1], [], []>} : vector<16x16xf32>, vector<16x8xf32>, vector<16x8xf32> -> vector<16x8xf32>
    %136 = vector.broadcast %59 : vector<16x1xf32> to vector<16x8xf32>
    %137 = arith.addf %135, %136 : vector<16x8xf32>
    %cst_54 = arith.constant 0.000000e+00 : f32
    %138 = vector.broadcast %cst_54 : f32 to vector<16x8xf32>
    %139 = arith.maximumf %137, %138 : vector<16x8xf32>
    %140 = vector.broadcast %62 : vector<16x1xf32> to vector<16x8xf32>
    %141 = arith.mulf %139, %140 : vector<16x8xf32>
    %cst_55 = arith.constant dense<0.000000e+00> : vector<8xf32>
    %142 = vector.multi_reduction <add>, %141, %cst_55 [0] : vector<16x8xf32> to vector<8xf32>
    %143 = vector.shape_cast %142 : vector<8xf32> to vector<1x8xf32>
    %144 = vector.broadcast %65 : vector<1x1xf32> to vector<1x8xf32>
    %145 = arith.addf %143, %144 : vector<1x8xf32>
    %c2 = arith.constant 2 : index
    %c0_56 = arith.constant 0 : index
    %146 = vector.load %arg21[%c2, %c0_56] : memref<8x8xf32, #tpu.memory_space<vmem>>, vector<1x8xf32>
    tpu.vector_store %arg21[%c2, %c0_56], %145 {strides = array<i32>} : memref<8x8xf32, #tpu.memory_space<vmem>>, vector<1x8xf32>,
    %147 = vector.extract_strided_slice %47 {offsets = [3, 0], sizes = [1, 8], strides = [1, 1]} : vector<8x8xf32> to vector<1x8xf32>
    %148 = vector.extract_strided_slice %7 {offsets = [3, 0], sizes = [1, 8], strides = [1, 1]} : vector<8x8xf32> to vector<1x8xf32>
    %149 = vector.extract_strided_slice %50 {offsets = [0, 0], sizes = [16, 1], strides = [1, 1]} : vector<16x2xf32> to vector<16x1xf32>
    %150 = vector.broadcast %149 : vector<16x1xf32> to vector<16x8xf32>
    %151 = vector.broadcast %147 : vector<1x8xf32> to vector<16x8xf32>
    %152 = arith.mulf %150, %151 : vector<16x8xf32>
    %153 = vector.extract_strided_slice %50 {offsets = [0, 1], sizes = [16, 1], strides = [1, 1]} : vector<16x2xf32> to vector<16x1xf32>
    %154 = vector.broadcast %153 : vector<16x1xf32> to vector<16x8xf32>
    %155 = vector.broadcast %148 : vector<1x8xf32> to vector<16x8xf32>
    %156 = arith.mulf %154, %155 : vector<16x8xf32>
    %157 = arith.addf %152, %156 : vector<16x8xf32>
    %158 = vector.broadcast %53 : vector<16x1xf32> to vector<16x8xf32>
    %159 = arith.addf %157, %158 : vector<16x8xf32>
    %cst_57 = arith.constant 0.000000e+00 : f32
    %160 = vector.broadcast %cst_57 : f32 to vector<16x8xf32>
    %161 = arith.maximumf %159, %160 : vector<16x8xf32>
    %cst_58 = arith.constant dense<0.000000e+00> : vector<16x8xf32>
    %162 = tpu.matmul %56, %161, %cst_58 {dimension_numbers = #tpu.dot_dimension_numbers<[1], [0], [0], [1], [0, 0, 1, 1], [], []>} : vector<16x16xf32>, vector<16x8xf32>, vector<16x8xf32> -> vector<16x8xf32>
    %163 = vector.broadcast %59 : vector<16x1xf32> to vector<16x8xf32>
    %164 = arith.addf %162, %163 : vector<16x8xf32>
    %cst_59 = arith.constant 0.000000e+00 : f32
    %165 = vector.broadcast %cst_59 : f32 to vector<16x8xf32>
    %166 = arith.maximumf %164, %165 : vector<16x8xf32>
    %167 = vector.broadcast %62 : vector<16x1xf32> to vector<16x8xf32>
    %168 = arith.mulf %166, %167 : vector<16x8xf32>
    %cst_60 = arith.constant dense<0.000000e+00> : vector<8xf32>
    %169 = vector.multi_reduction <add>, %168, %cst_60 [0] : vector<16x8xf32> to vector<8xf32>
    %170 = vector.shape_cast %169 : vector<8xf32> to vector<1x8xf32>
    %171 = vector.broadcast %65 : vector<1x1xf32> to vector<1x8xf32>
    %172 = arith.addf %170, %171 : vector<1x8xf32>
    %c3 = arith.constant 3 : index
    %c0_61 = arith.constant 0 : index
    %173 = vector.load %arg21[%c3, %c0_61] : memref<8x8xf32, #tpu.memory_space<vmem>>, vector<1x8xf32>
    tpu.vector_store %arg21[%c3, %c0_61], %172 {strides = array<i32>} : memref<8x8xf32, #tpu.memory_space<vmem>>, vector<1x8xf32>,
    %174 = vector.extract_strided_slice %47 {offsets = [4, 0], sizes = [1, 8], strides = [1, 1]} : vector<8x8xf32> to vector<1x8xf32>
    %175 = vector.extract_strided_slice %7 {offsets = [4, 0], sizes = [1, 8], strides = [1, 1]} : vector<8x8xf32> to vector<1x8xf32>
    %176 = vector.extract_strided_slice %50 {offsets = [0, 0], sizes = [16, 1], strides = [1, 1]} : vector<16x2xf32> to vector<16x1xf32>
    %177 = vector.broadcast %176 : vector<16x1xf32> to vector<16x8xf32>
    %178 = vector.broadcast %174 : vector<1x8xf32> to vector<16x8xf32>
    %179 = arith.mulf %177, %178 : vector<16x8xf32>
    %180 = vector.extract_strided_slice %50 {offsets = [0, 1], sizes = [16, 1], strides = [1, 1]} : vector<16x2xf32> to vector<16x1xf32>
    %181 = vector.broadcast %180 : vector<16x1xf32> to vector<16x8xf32>
    %182 = vector.broadcast %175 : vector<1x8xf32> to vector<16x8xf32>
    %183 = arith.mulf %181, %182 : vector<16x8xf32>
    %184 = arith.addf %179, %183 : vector<16x8xf32>
    %185 = vector.broadcast %53 : vector<16x1xf32> to vector<16x8xf32>
    %186 = arith.addf %184, %185 : vector<16x8xf32>
    %cst_62 = arith.constant 0.000000e+00 : f32
    %187 = vector.broadcast %cst_62 : f32 to vector<16x8xf32>
    %188 = arith.maximumf %186, %187 : vector<16x8xf32>
    %cst_63 = arith.constant dense<0.000000e+00> : vector<16x8xf32>
    %189 = tpu.matmul %56, %188, %cst_63 {dimension_numbers = #tpu.dot_dimension_numbers<[1], [0], [0], [1], [0, 0, 1, 1], [], []>} : vector<16x16xf32>, vector<16x8xf32>, vector<16x8xf32> -> vector<16x8xf32>
    %190 = vector.broadcast %59 : vector<16x1xf32> to vector<16x8xf32>
    %191 = arith.addf %189, %190 : vector<16x8xf32>
    %cst_64 = arith.constant 0.000000e+00 : f32
    %192 = vector.broadcast %cst_64 : f32 to vector<16x8xf32>
    %193 = arith.maximumf %191, %192 : vector<16x8xf32>
    %194 = vector.broadcast %62 : vector<16x1xf32> to vector<16x8xf32>
    %195 = arith.mulf %193, %194 : vector<16x8xf32>
    %cst_65 = arith.constant dense<0.000000e+00> : vector<8xf32>
    %196 = vector.multi_reduction <add>, %195, %cst_65 [0] : vector<16x8xf32> to vector<8xf32>
    %197 = vector.shape_cast %196 : vector<8xf32> to vector<1x8xf32>
    %198 = vector.broadcast %65 : vector<1x1xf32> to vector<1x8xf32>
    %199 = arith.addf %197, %198 : vector<1x8xf32>
    %c4 = arith.constant 4 : index
    %c0_66 = arith.constant 0 : index
    %200 = vector.load %arg21[%c4, %c0_66] : memref<8x8xf32, #tpu.memory_space<vmem>>, vector<1x8xf32>
    tpu.vector_store %arg21[%c4, %c0_66], %199 {strides = array<i32>} : memref<8x8xf32, #tpu.memory_space<vmem>>, vector<1x8xf32>,
    %201 = vector.extract_strided_slice %47 {offsets = [5, 0], sizes = [1, 8], strides = [1, 1]} : vector<8x8xf32> to vector<1x8xf32>
    %202 = vector.extract_strided_slice %7 {offsets = [5, 0], sizes = [1, 8], strides = [1, 1]} : vector<8x8xf32> to vector<1x8xf32>
    %203 = vector.extract_strided_slice %50 {offsets = [0, 0], sizes = [16, 1], strides = [1, 1]} : vector<16x2xf32> to vector<16x1xf32>
    %204 = vector.broadcast %203 : vector<16x1xf32> to vector<16x8xf32>
    %205 = vector.broadcast %201 : vector<1x8xf32> to vector<16x8xf32>
    %206 = arith.mulf %204, %205 : vector<16x8xf32>
    %207 = vector.extract_strided_slice %50 {offsets = [0, 1], sizes = [16, 1], strides = [1, 1]} : vector<16x2xf32> to vector<16x1xf32>
    %208 = vector.broadcast %207 : vector<16x1xf32> to vector<16x8xf32>
    %209 = vector.broadcast %202 : vector<1x8xf32> to vector<16x8xf32>
    %210 = arith.mulf %208, %209 : vector<16x8xf32>
    %211 = arith.addf %206, %210 : vector<16x8xf32>
    %212 = vector.broadcast %53 : vector<16x1xf32> to vector<16x8xf32>
    %213 = arith.addf %211, %212 : vector<16x8xf32>
    %cst_67 = arith.constant 0.000000e+00 : f32
    %214 = vector.broadcast %cst_67 : f32 to vector<16x8xf32>
    %215 = arith.maximumf %213, %214 : vector<16x8xf32>
    %cst_68 = arith.constant dense<0.000000e+00> : vector<16x8xf32>
    %216 = tpu.matmul %56, %215, %cst_68 {dimension_numbers = #tpu.dot_dimension_numbers<[1], [0], [0], [1], [0, 0, 1, 1], [], []>} : vector<16x16xf32>, vector<16x8xf32>, vector<16x8xf32> -> vector<16x8xf32>
    %217 = vector.broadcast %59 : vector<16x1xf32> to vector<16x8xf32>
    %218 = arith.addf %216, %217 : vector<16x8xf32>
    %cst_69 = arith.constant 0.000000e+00 : f32
    %219 = vector.broadcast %cst_69 : f32 to vector<16x8xf32>
    %220 = arith.maximumf %218, %219 : vector<16x8xf32>
    %221 = vector.broadcast %62 : vector<16x1xf32> to vector<16x8xf32>
    %222 = arith.mulf %220, %221 : vector<16x8xf32>
    %cst_70 = arith.constant dense<0.000000e+00> : vector<8xf32>
    %223 = vector.multi_reduction <add>, %222, %cst_70 [0] : vector<16x8xf32> to vector<8xf32>
    %224 = vector.shape_cast %223 : vector<8xf32> to vector<1x8xf32>
    %225 = vector.broadcast %65 : vector<1x1xf32> to vector<1x8xf32>
    %226 = arith.addf %224, %225 : vector<1x8xf32>
    %c5 = arith.constant 5 : index
    %c0_71 = arith.constant 0 : index
    %227 = vector.load %arg21[%c5, %c0_71] : memref<8x8xf32, #tpu.memory_space<vmem>>, vector<1x8xf32>
    tpu.vector_store %arg21[%c5, %c0_71], %226 {strides = array<i32>} : memref<8x8xf32, #tpu.memory_space<vmem>>, vector<1x8xf32>,
    %228 = vector.extract_strided_slice %47 {offsets = [6, 0], sizes = [1, 8], strides = [1, 1]} : vector<8x8xf32> to vector<1x8xf32>
    %229 = vector.extract_strided_slice %7 {offsets = [6, 0], sizes = [1, 8], strides = [1, 1]} : vector<8x8xf32> to vector<1x8xf32>
    %230 = vector.extract_strided_slice %50 {offsets = [0, 0], sizes = [16, 1], strides = [1, 1]} : vector<16x2xf32> to vector<16x1xf32>
    %231 = vector.broadcast %230 : vector<16x1xf32> to vector<16x8xf32>
    %232 = vector.broadcast %228 : vector<1x8xf32> to vector<16x8xf32>
    %233 = arith.mulf %231, %232 : vector<16x8xf32>
    %234 = vector.extract_strided_slice %50 {offsets = [0, 1], sizes = [16, 1], strides = [1, 1]} : vector<16x2xf32> to vector<16x1xf32>
    %235 = vector.broadcast %234 : vector<16x1xf32> to vector<16x8xf32>
    %236 = vector.broadcast %229 : vector<1x8xf32> to vector<16x8xf32>
    %237 = arith.mulf %235, %236 : vector<16x8xf32>
    %238 = arith.addf %233, %237 : vector<16x8xf32>
    %239 = vector.broadcast %53 : vector<16x1xf32> to vector<16x8xf32>
    %240 = arith.addf %238, %239 : vector<16x8xf32>
    %cst_72 = arith.constant 0.000000e+00 : f32
    %241 = vector.broadcast %cst_72 : f32 to vector<16x8xf32>
    %242 = arith.maximumf %240, %241 : vector<16x8xf32>
    %cst_73 = arith.constant dense<0.000000e+00> : vector<16x8xf32>
    %243 = tpu.matmul %56, %242, %cst_73 {dimension_numbers = #tpu.dot_dimension_numbers<[1], [0], [0], [1], [0, 0, 1, 1], [], []>} : vector<16x16xf32>, vector<16x8xf32>, vector<16x8xf32> -> vector<16x8xf32>
    %244 = vector.broadcast %59 : vector<16x1xf32> to vector<16x8xf32>
    %245 = arith.addf %243, %244 : vector<16x8xf32>
    %cst_74 = arith.constant 0.000000e+00 : f32
    %246 = vector.broadcast %cst_74 : f32 to vector<16x8xf32>
    %247 = arith.maximumf %245, %246 : vector<16x8xf32>
    %248 = vector.broadcast %62 : vector<16x1xf32> to vector<16x8xf32>
    %249 = arith.mulf %247, %248 : vector<16x8xf32>
    %cst_75 = arith.constant dense<0.000000e+00> : vector<8xf32>
    %250 = vector.multi_reduction <add>, %249, %cst_75 [0] : vector<16x8xf32> to vector<8xf32>
    %251 = vector.shape_cast %250 : vector<8xf32> to vector<1x8xf32>
    %252 = vector.broadcast %65 : vector<1x1xf32> to vector<1x8xf32>
    %253 = arith.addf %251, %252 : vector<1x8xf32>
    %c6 = arith.constant 6 : index
    %c0_76 = arith.constant 0 : index
    %254 = vector.load %arg21[%c6, %c0_76] : memref<8x8xf32, #tpu.memory_space<vmem>>, vector<1x8xf32>
    tpu.vector_store %arg21[%c6, %c0_76], %253 {strides = array<i32>} : memref<8x8xf32, #tpu.memory_space<vmem>>, vector<1x8xf32>,
    %255 = vector.extract_strided_slice %47 {offsets = [7, 0], sizes = [1, 8], strides = [1, 1]} : vector<8x8xf32> to vector<1x8xf32>
    %256 = vector.extract_strided_slice %7 {offsets = [7, 0], sizes = [1, 8], strides = [1, 1]} : vector<8x8xf32> to vector<1x8xf32>
    %257 = vector.extract_strided_slice %50 {offsets = [0, 0], sizes = [16, 1], strides = [1, 1]} : vector<16x2xf32> to vector<16x1xf32>
    %258 = vector.broadcast %257 : vector<16x1xf32> to vector<16x8xf32>
    %259 = vector.broadcast %255 : vector<1x8xf32> to vector<16x8xf32>
    %260 = arith.mulf %258, %259 : vector<16x8xf32>
    %261 = vector.extract_strided_slice %50 {offsets = [0, 1], sizes = [16, 1], strides = [1, 1]} : vector<16x2xf32> to vector<16x1xf32>
    %262 = vector.broadcast %261 : vector<16x1xf32> to vector<16x8xf32>
    %263 = vector.broadcast %256 : vector<1x8xf32> to vector<16x8xf32>
    %264 = arith.mulf %262, %263 : vector<16x8xf32>
    %265 = arith.addf %260, %264 : vector<16x8xf32>
    %266 = vector.broadcast %53 : vector<16x1xf32> to vector<16x8xf32>
    %267 = arith.addf %265, %266 : vector<16x8xf32>
    %cst_77 = arith.constant 0.000000e+00 : f32
    %268 = vector.broadcast %cst_77 : f32 to vector<16x8xf32>
    %269 = arith.maximumf %267, %268 : vector<16x8xf32>
    %cst_78 = arith.constant dense<0.000000e+00> : vector<16x8xf32>
    %270 = tpu.matmul %56, %269, %cst_78 {dimension_numbers = #tpu.dot_dimension_numbers<[1], [0], [0], [1], [0, 0, 1, 1], [], []>} : vector<16x16xf32>, vector<16x8xf32>, vector<16x8xf32> -> vector<16x8xf32>
    %271 = vector.broadcast %59 : vector<16x1xf32> to vector<16x8xf32>
    %272 = arith.addf %270, %271 : vector<16x8xf32>
    %cst_79 = arith.constant 0.000000e+00 : f32
    %273 = vector.broadcast %cst_79 : f32 to vector<16x8xf32>
    %274 = arith.maximumf %272, %273 : vector<16x8xf32>
    %275 = vector.broadcast %62 : vector<16x1xf32> to vector<16x8xf32>
    %276 = arith.mulf %274, %275 : vector<16x8xf32>
    %cst_80 = arith.constant dense<0.000000e+00> : vector<8xf32>
    %277 = vector.multi_reduction <add>, %276, %cst_80 [0] : vector<16x8xf32> to vector<8xf32>
    %278 = vector.shape_cast %277 : vector<8xf32> to vector<1x8xf32>
    %279 = vector.broadcast %65 : vector<1x1xf32> to vector<1x8xf32>
    %280 = arith.addf %278, %279 : vector<1x8xf32>
    %c7 = arith.constant 7 : index
    %c0_81 = arith.constant 0 : index
    %281 = vector.load %arg21[%c7, %c0_81] : memref<8x8xf32, #tpu.memory_space<vmem>>, vector<1x8xf32>
    tpu.vector_store %arg21[%c7, %c0_81], %280 {strides = array<i32>} : memref<8x8xf32, #tpu.memory_space<vmem>>, vector<1x8xf32>,
    %c0_82 = arith.constant 0 : index
    %c0_83 = arith.constant 0 : index
    %282 = vector.load %arg21[%c0_82, %c0_83] : memref<8x8xf32, #tpu.memory_space<vmem>>, vector<8x8xf32>
    %cst_84 = arith.constant dense<0.000000e+00> : vector<8x8xf32>
    %283 = tpu.matmul %282, %34, %cst_84 {dimension_numbers = #tpu.dot_dimension_numbers<[1], [0], [0], [1], [0, 0, 1, 1], [], []>} : vector<8x8xf32>, vector<8x8xf32>, vector<8x8xf32> -> vector<8x8xf32>
    %284 = arith.index_cast %arg1 : i32 to index
    %c0_85 = arith.constant 0 : index
    %c0_86 = arith.constant 0 : index
    %285 = vector.load %arg12[%284, %c0_85, %c0_86] : memref<4x8x32xf32, #tpu.memory_space<vmem>>, vector<1x8x32xf32>
    %286 = vector.shape_cast %285 : vector<1x8x32xf32> to vector<8x32xf32>
    %cst_87 = arith.constant dense<0.000000e+00> : vector<8x32xf32>
    %287 = tpu.matmul %283, %286, %cst_87 {dimension_numbers = #tpu.dot_dimension_numbers<[1], [0], [0], [1], [0, 0, 1, 1], [], []>} : vector<8x8xf32>, vector<8x32xf32>, vector<8x32xf32> -> vector<8x32xf32>
    %c0_i32 = arith.constant 0 : i32
    %288 = arith.cmpi eq, %arg1, %c0_i32 : i32
    %289 = arith.extui %288 : i1 to i32
    %c0_i32_88 = arith.constant 0 : i32
    %290 = arith.cmpi ne, %289, %c0_i32_88 : i32
    scf.if %290 {
      %c0_95 = arith.constant 0 : index
      %c0_96 = arith.constant 0 : index
      %297 = vector.load %arg13[%c0_95, %c0_96] : memref<1x32xf32, #tpu.memory_space<vmem>>, vector<1x32xf32>
      %298 = vector.shape_cast %297 : vector<1x32xf32> to vector<1x32xf32>
      %299 = vector.broadcast %298 : vector<1x32xf32> to vector<8x32xf32>
      %c0_97 = arith.constant 0 : index
      %c0_98 = arith.constant 0 : index
      %c0_99 = arith.constant 0 : index
      %300 = vector.load %arg20[%c0_97, %c0_98, %c0_99] : memref<1x8x32xf32, #tpu.memory_space<vmem>>, vector<1x8x32xf32>
      %301 = vector.shape_cast %300 : vector<1x8x32xf32> to vector<8x32xf32>
      %302 = vector.shape_cast %299 : vector<8x32xf32> to vector<1x8x32xf32>
      tpu.vector_store %arg20[%c0_97, %c0_98, %c0_99], %302 {strides = array<i32>} : memref<1x8x32xf32, #tpu.memory_space<vmem>>, vector<1x8x32xf32>,
    } else {
    }
    %c0_89 = arith.constant 0 : index
    %c0_90 = arith.constant 0 : index
    %c0_91 = arith.constant 0 : index
    %291 = vector.load %arg20[%c0_89, %c0_90, %c0_91] : memref<1x8x32xf32, #tpu.memory_space<vmem>>, vector<1x8x32xf32>
    %292 = vector.shape_cast %291 : vector<1x8x32xf32> to vector<8x32xf32>
    %293 = arith.addf %292, %287 : vector<8x32xf32>
    %c0_92 = arith.constant 0 : index
    %c0_93 = arith.constant 0 : index
    %c0_94 = arith.constant 0 : index
    %294 = vector.load %arg20[%c0_92, %c0_93, %c0_94] : memref<1x8x32xf32, #tpu.memory_space<vmem>>, vector<1x8x32xf32>
    %295 = vector.shape_cast %294 : vector<1x8x32xf32> to vector<8x32xf32>
    %296 = vector.shape_cast %293 : vector<8x32xf32> to vector<1x8x32xf32>
    tpu.vector_store %arg20[%c0_92, %c0_93, %c0_94], %296 {strides = array<i32>} : memref<1x8x32xf32, #tpu.memory_space<vmem>>, vector<1x8x32xf32>,
    return
  }
  func.func @transform_0(%arg0: i32, %arg1: i32) -> (i32, i32, i32) {
    %c0_i32 = arith.constant 0 : i32
    %c0_i32_0 = arith.constant 0 : i32
    %c0_i32_1 = arith.constant 0 : i32
    return %arg0, %c0_i32, %c0_i32_0 : i32, i32, i32
  }
  func.func @transform_1(%arg0: i32, %arg1: i32) -> (i32, i32, i32) {
    %c0_i32 = arith.constant 0 : i32
    %c0_i32_0 = arith.constant 0 : i32
    %c0_i32_1 = arith.constant 0 : i32
    return %arg0, %c0_i32, %c0_i32_0 : i32, i32, i32
  }
  func.func @transform_2(%arg0: i32, %arg1: i32) -> (i32, i32, i32) {
    %c0_i32 = arith.constant 0 : i32
    %c0_i32_0 = arith.constant 0 : i32
    %c0_i32_1 = arith.constant 0 : i32
    return %arg0, %c0_i32, %c0_i32_0 : i32, i32, i32
  }
  func.func @transform_3(%arg0: i32, %arg1: i32) -> (i32, i32, i32) {
    %c0_i32 = arith.constant 0 : i32
    %c0_i32_0 = arith.constant 0 : i32
    %c0_i32_1 = arith.constant 0 : i32
    return %arg0, %c0_i32, %c0_i32_0 : i32, i32, i32
  }
  func.func @transform_4(%arg0: i32, %arg1: i32) -> (i32, i32, i32) {
    %c0_i32 = arith.constant 0 : i32
    %c0_i32_0 = arith.constant 0 : i32
    %c0_i32_1 = arith.constant 0 : i32
    %c0_i32_2 = arith.constant 0 : i32
    return %c0_i32, %c0_i32_0, %c0_i32_1 : i32, i32, i32
  }
  func.func @transform_5(%arg0: i32, %arg1: i32) -> (i32, i32, i32) {
    %c0_i32 = arith.constant 0 : i32
    %c0_i32_0 = arith.constant 0 : i32
    %c0_i32_1 = arith.constant 0 : i32
    %c0_i32_2 = arith.constant 0 : i32
    return %c0_i32, %c0_i32_0, %c0_i32_1 : i32, i32, i32
  }
  func.func @transform_6(%arg0: i32, %arg1: i32) -> (i32, i32, i32) {
    %c0_i32 = arith.constant 0 : i32
    %c0_i32_0 = arith.constant 0 : i32
    %c0_i32_1 = arith.constant 0 : i32
    %c0_i32_2 = arith.constant 0 : i32
    return %c0_i32, %c0_i32_0, %c0_i32_1 : i32, i32, i32
  }
  func.func @transform_7(%arg0: i32, %arg1: i32) -> (i32, i32, i32) {
    %c0_i32 = arith.constant 0 : i32
    %c0_i32_0 = arith.constant 0 : i32
    %c0_i32_1 = arith.constant 0 : i32
    %c0_i32_2 = arith.constant 0 : i32
    return %c0_i32, %c0_i32_0, %c0_i32_1 : i32, i32, i32
  }
  func.func @transform_8(%arg0: i32, %arg1: i32) -> (i32, i32, i32) {
    %c0_i32 = arith.constant 0 : i32
    %c0_i32_0 = arith.constant 0 : i32
    %c0_i32_1 = arith.constant 0 : i32
    %c0_i32_2 = arith.constant 0 : i32
    return %c0_i32, %c0_i32_0, %c0_i32_1 : i32, i32, i32
  }
  func.func @transform_9(%arg0: i32, %arg1: i32) -> (i32, i32, i32) {
    %c0_i32 = arith.constant 0 : i32
    %c0_i32_0 = arith.constant 0 : i32
    %c0_i32_1 = arith.constant 0 : i32
    %c0_i32_2 = arith.constant 0 : i32
    return %c0_i32, %c0_i32_0, %c0_i32_1 : i32, i32, i32
  }
  func.func @transform_10(%arg0: i32, %arg1: i32) -> (i32, i32, i32) {
    %c0_i32 = arith.constant 0 : i32
    %c0_i32_0 = arith.constant 0 : i32
    %c0_i32_1 = arith.constant 0 : i32
    %c0_i32_2 = arith.constant 0 : i32
    return %c0_i32, %c0_i32_0, %c0_i32_1 : i32, i32, i32
  }
  func.func @transform_11(%arg0: i32, %arg1: i32) -> (i32, i32) {
    %c0_i32 = arith.constant 0 : i32
    %c0_i32_0 = arith.constant 0 : i32
    %c0_i32_1 = arith.constant 0 : i32
    return %c0_i32, %c0_i32_0 : i32, i32
  }
  func.func @transform_12(%arg0: i32, %arg1: i32) -> (i32, i32, i32) {
    %c0_i32 = arith.constant 0 : i32
    %c0_i32_0 = arith.constant 0 : i32
    %c0_i32_1 = arith.constant 0 : i32
    %c0_i32_2 = arith.constant 0 : i32
    return %c0_i32, %c0_i32_0, %c0_i32_1 : i32, i32, i32
  }
  func.func @transform_13(%arg0: i32, %arg1: i32) -> (i32, i32, i32) {
    %c0_i32 = arith.constant 0 : i32
    %c0_i32_0 = arith.constant 0 : i32
    %c0_i32_1 = arith.constant 0 : i32
    %c0_i32_2 = arith.constant 0 : i32
    return %c0_i32, %c0_i32_0, %c0_i32_1 : i32, i32, i32
  }
  func.func @transform_14(%arg0: i32, %arg1: i32) -> (i32, i32, i32) {
    %c0_i32 = arith.constant 0 : i32
    %c0_i32_0 = arith.constant 0 : i32
    %c0_i32_1 = arith.constant 0 : i32
    %c0_i32_2 = arith.constant 0 : i32
    return %c0_i32, %c0_i32_0, %c0_i32_1 : i32, i32, i32
  }
  func.func @transform_15(%arg0: i32, %arg1: i32) -> (i32, i32, i32) {
    %c0_i32 = arith.constant 0 : i32
    %c0_i32_0 = arith.constant 0 : i32
    %c0_i32_1 = arith.constant 0 : i32
    %c0_i32_2 = arith.constant 0 : i32
    return %c0_i32, %c0_i32_0, %c0_i32_1 : i32, i32, i32
  }
  func.func @transform_16(%arg0: i32, %arg1: i32) -> (i32, i32, i32) {
    %c0_i32 = arith.constant 0 : i32
    %c0_i32_0 = arith.constant 0 : i32
    %c0_i32_1 = arith.constant 0 : i32
    %c0_i32_2 = arith.constant 0 : i32
    return %c0_i32, %c0_i32_0, %c0_i32_1 : i32, i32, i32
  }
  func.func @transform_17(%arg0: i32, %arg1: i32) -> (i32, i32, i32) {
    %c0_i32 = arith.constant 0 : i32
    %c0_i32_0 = arith.constant 0 : i32
    %c0_i32_1 = arith.constant 0 : i32
    %c0_i32_2 = arith.constant 0 : i32
    return %c0_i32, %c0_i32_0, %c0_i32_1 : i32, i32, i32
  }
  func.func @transform_18(%arg0: i32, %arg1: i32) -> (i32, i32, i32) {
    %c0_i32 = arith.constant 0 : i32
    %c0_i32_0 = arith.constant 0 : i32
    %c0_i32_1 = arith.constant 0 : i32
    return %arg0, %c0_i32, %c0_i32_0 : i32, i32, i32
  }
}

</mosaic_0001>

<llo_original>
// kernel: tpu_custom_call.1
$region0: #{tpu_custom_call.1}
  #allocation0 [shape = 'u32[]', space=smem, size = 0x4, offset = 0x4, fixed_abs, tag = 'smem constant byte address 0x4 - core index']
  #allocation1 [shape = 'u32[144,128]{1,0:T(1,128)}', space=vmem, size = 0x12000, scoped, tag = 'internal scratch']
  #allocation2 [shape = 'f32[8,8]{1,0:T(8,128)}', space=vmem, size = 0x1000, scoped, tag = 'scratch operand']
  %s0 = inlined_call_operand.vmem [shape: f32[2,8,32], index: 0, kind: input, shape index: {}]
  %s1 = inlined_call_operand.vmem [shape: f32[2,8,32], index: 1, kind: input, shape index: {}]
  %s2 = inlined_call_operand.vmem [shape: f32[2,8,32], index: 2, kind: input, shape index: {}]
  %s3 = inlined_call_operand.vmem [shape: f32[2,8,8], index: 3, kind: input, shape index: {}]
  %s4 = inlined_call_operand.vmem [shape: f32[4,32,8], index: 4, kind: input, shape index: {}]
  %s5 = inlined_call_operand.vmem [shape: f32[4,1,8], index: 5, kind: input, shape index: {}]
  %s6 = inlined_call_operand.vmem [shape: f32[4,32,8], index: 6, kind: input, shape index: {}]
  %s7 = inlined_call_operand.vmem [shape: f32[4,1,8], index: 7, kind: input, shape index: {}]
  %s8 = inlined_call_operand.vmem [shape: f32[4,32,8], index: 8, kind: input, shape index: {}]
  %s9 = inlined_call_operand.vmem [shape: f32[4,1,8], index: 9, kind: input, shape index: {}]
  %s10 = inlined_call_operand.vmem [shape: f32[4,8,32], index: 10, kind: input, shape index: {}]
  %s11 = inlined_call_operand.vmem [shape: f32[1,32], index: 11, kind: input, shape index: {}]
  %s12 = inlined_call_operand.vmem [shape: f32[4,16,2], index: 12, kind: input, shape index: {}]
  %s13 = inlined_call_operand.vmem [shape: f32[4,16,1], index: 13, kind: input, shape index: {}]
  %s14 = inlined_call_operand.vmem [shape: f32[4,16,16], index: 14, kind: input, shape index: {}]
  %s15 = inlined_call_operand.vmem [shape: f32[4,16,1], index: 15, kind: input, shape index: {}]
  %s16 = inlined_call_operand.vmem [shape: f32[4,16,1], index: 16, kind: input, shape index: {}]
  %s17 = inlined_call_operand.vmem [shape: f32[4,1,1], index: 17, kind: input, shape index: {}]
  %s18 = inlined_call_operand.hbm [shape: f32[2,8,32], index: 18, kind: output, shape index: {}]
  %s19 = sld [smem:[#allocation0]]
  $region109: #{tpu_custom_call.1} parent=0
    _
  %s21 = ssub.s32 1, %s19
  %s22 = scalar_select 0, %s21, %s19
  $region1: #{tpu_custom_call.1} parent=0
    #allocation3 [shape = 'u8[8192]{0}', space=vmem, size = 0x2000, scoped, tag = 'output window, operand 0']
    #allocation4 [shape = 's32[2]{0}', space=sflag, size = 0x8, scoped, tag = 'scoped memory for tpu_custom_call.1']
    %23 = vsyncpa [#allocation4], 0
    %s24 = scalar_lea.sflag [#allocation4], 1
    %25 = vsyncpa %s24, 0
    loop: start=0, step=1, limit=10
    $region2: #{tpu_custom_call.1} parent=1 // loop_pre_header
      _
    $region3: #{tpu_custom_call.1} parent=1 // loop_header
      %s27 = sphi 0, %s31
      %p28 = scmp.ge.s32.totalorder %s27, 10
      %s34 = sphi 0, %s46
      %s35 = sphi 0, %s42
      %s36 = sphi 0, %s34
      %s37 = sphi 0, %s35
      %s38 = sphi 0, %s36
      %s39 = sphi 0, %s37
      %s49 = sphi 0, %s51
      %s52 = sphi 0, %s49
      %s53 = sphi 0, %s52
      %s69 = sphi 0, %s53
      %s75 = sphi 0, %s77
      %s78 = sphi 0, %s75
      %s79 = sphi 0, %s78
      %s95 = sphi 0, %s79
      %s101 = sphi 0, %s103
      %s104 = sphi 0, %s101
      %s105 = sphi 0, %s104
      %s121 = sphi 0, %s105
      %s127 = sphi 0, %s129
      %s130 = sphi 0, %s127
      %s131 = sphi 0, %s130
      %s147 = sphi 0, %s131
      %s151 = sphi 0, %s151
      %s153 = sphi 0, %s151
      %s154 = sphi 0, %s153
      %s168 = sphi 0, %s154
      %s172 = sphi 0, %s172
      %s174 = sphi 0, %s172
      %s175 = sphi 0, %s174
      %s189 = sphi 0, %s175
      %s193 = sphi 0, %s193
      %s195 = sphi 0, %s193
      %s196 = sphi 0, %s195
      %s210 = sphi 0, %s196
      %s214 = sphi 0, %s214
      %s216 = sphi 0, %s214
      %s217 = sphi 0, %s216
      %s231 = sphi 0, %s217
      %s235 = sphi 0, %s235
      %s237 = sphi 0, %s235
      %s238 = sphi 0, %s237
      %s252 = sphi 0, %s238
      %s256 = sphi 0, %s256
      %s258 = sphi 0, %s256
      %s259 = sphi 0, %s258
      %s273 = sphi 0, %s259
      %s277 = sphi 0, %s277
      %s279 = sphi 0, %s277
      %s280 = sphi 0, %s279
      %s294 = sphi 0, %s280
      %s298 = sphi 0, %s298
      %s300 = sphi 0, %s298
      %s301 = sphi 0, %s300
      %s315 = sphi 0, %s301
      %s319 = sphi 0, %s319
      %s321 = sphi 0, %s319
      %s322 = sphi 0, %s321
      %s336 = sphi 0, %s322
      %s340 = sphi 0, %s340
      %s342 = sphi 0, %s340
      %s343 = sphi 0, %s342
      %s357 = sphi 0, %s343
      %s361 = sphi 0, %s361
      %s363 = sphi 0, %s361
      %s364 = sphi 0, %s363
      %s378 = sphi 0, %s364
      %s382 = sphi 0, %s382
      %s384 = sphi 0, %s382
      %s385 = sphi 0, %s384
      %s399 = sphi 0, %s385
      %s403 = sphi 0, %s403
      %s405 = sphi 0, %s403
      %s406 = sphi 0, %s405
      %s420 = sphi 0, %s406
      %s424 = sphi 0, %s424
      %s426 = sphi 0, %s424
      %s427 = sphi 0, %s426
      %s441 = sphi 0, %s427
      %s447 = sphi 0, %s449
      %s450 = sphi 0, %s447
      %s451 = sphi 0, %s450
      %s467 = sphi 0, %s451
    $region4: #{tpu_custom_call.1} parent=1 // loop_header_branch
      %30 = sbr.rel (%p28) target = $region8
    $region5: #{tpu_custom_call.1} parent=1 // loop_body
      %s32 = ssub.s32 %s27, 1
      %s33 = ssub.s32 %s27, 2
      %s40 = sadd.s32 1, %s35
      %p41 = scmp.ge.s32.totalorder %s40, 4
      %s42 = scalar_select %p41, 0, %s40
      %s43 = sadd.s32 1, %s34
      %s44 = scalar_select %p41, %s43, %s34
      %p45 = scmp.ge.s32.totalorder %s44, 2
      %s46 = scalar_select %p45, 0, %s44
      %s47 = ssub.s32 %s34, %s46
      %p48 = scmp.eq.s32.totalorder %s47, 0
      %s50 = sadd.s32 %s49, 1
      %s51 = scalar_select %p48, %s49, %s50
      %p54 = pneg %p48
      %p55 = scmp.eq.s32.totalorder %s27, 7
      %p56 = por %p54, %p55
      %p57 = scmp.ne.s32.totalorder %s49, %s52
      %p58 = scmp.eq.s32.totalorder %s27, 0
      %p59 = por %p57, %p58
      %p60 = scmp.ne.s32.totalorder %s49, %s52
      %p61 = scmp.eq.s32.totalorder %s32, 7
      %p62 = por %p60, %p61
      %p63 = scmp.ne.s32.totalorder %s52, %s53
      %p64 = scmp.eq.s32.totalorder %s32, 0
      %p65 = por %p63, %p64
      %p66 = scmp.ne.s32.totalorder %s52, %s53
      %p67 = scmp.eq.s32.totalorder %s33, 7
      %p68 = por %p66, %p67
      %p70 = scmp.ne.s32.totalorder %s53, %s69
      %p71 = scmp.eq.s32.totalorder %s33, 0
      %p72 = por %p70, %p71
      %s73 = ssub.s32 %s34, %s46
      %p74 = scmp.eq.s32.totalorder %s73, 0
      %s76 = sadd.s32 %s75, 1
      %s77 = scalar_select %p74, %s75, %s76
      %p80 = pneg %p74
      %p81 = scmp.eq.s32.totalorder %s27, 7
      %p82 = por %p80, %p81
      %p83 = scmp.ne.s32.totalorder %s75, %s78
      %p84 = scmp.eq.s32.totalorder %s27, 0
      %p85 = por %p83, %p84
      %p86 = scmp.ne.s32.totalorder %s75, %s78
      %p87 = scmp.eq.s32.totalorder %s32, 7
      %p88 = por %p86, %p87
      %p89 = scmp.ne.s32.totalorder %s78, %s79
      %p90 = scmp.eq.s32.totalorder %s32, 0
      %p91 = por %p89, %p90
      %p92 = scmp.ne.s32.totalorder %s78, %s79
      %p93 = scmp.eq.s32.totalorder %s33, 7
      %p94 = por %p92, %p93
      %p96 = scmp.ne.s32.totalorder %s79, %s95
      %p97 = scmp.eq.s32.totalorder %s33, 0
      %p98 = por %p96, %p97
      %s99 = ssub.s32 %s34, %s46
      %p100 = scmp.eq.s32.totalorder %s99, 0
      %s102 = sadd.s32 %s101, 1
      %s103 = scalar_select %p100, %s101, %s102
      %p106 = pneg %p100
      %p107 = scmp.eq.s32.totalorder %s27, 7
      %p108 = por %p106, %p107
      %p109 = scmp.ne.s32.totalorder %s101, %s104
      %p110 = scmp.eq.s32.totalorder %s27, 0
      %p111 = por %p109, %p110
      %p112 = scmp.ne.s32.totalorder %s101, %s104
      %p113 = scmp.eq.s32.totalorder %s32, 7
      %p114 = por %p112, %p113
      %p115 = scmp.ne.s32.totalorder %s104, %s105
      %p116 = scmp.eq.s32.totalorder %s32, 0
      %p117 = por %p115, %p116
      %p118 = scmp.ne.s32.totalorder %s104, %s105
      %p119 = scmp.eq.s32.totalorder %s33, 7
      %p120 = por %p118, %p119
      %p122 = scmp.ne.s32.totalorder %s105, %s121
      %p123 = scmp.eq.s32.totalorder %s33, 0
      %p124 = por %p122, %p123
      %s125 = ssub.s32 %s34, %s46
      %p126 = scmp.eq.s32.totalorder %s125, 0
      %s128 = sadd.s32 %s127, 1
      %s129 = scalar_select %p126, %s127, %s128
      %p132 = pneg %p126
      %p133 = scmp.eq.s32.totalorder %s27, 7
      %p134 = por %p132, %p133
      %p135 = scmp.ne.s32.totalorder %s127, %s130
      %p136 = scmp.eq.s32.totalorder %s27, 0
      %p137 = por %p135, %p136
      %p138 = scmp.ne.s32.totalorder %s127, %s130
      %p139 = scmp.eq.s32.totalorder %s32, 7
      %p140 = por %p138, %p139
      %p141 = scmp.ne.s32.totalorder %s130, %s131
      %p142 = scmp.eq.s32.totalorder %s32, 0
      %p143 = por %p141, %p142
      %p144 = scmp.ne.s32.totalorder %s130, %s131
      %p145 = scmp.eq.s32.totalorder %s33, 7
      %p146 = por %p144, %p145
      %p148 = scmp.ne.s32.totalorder %s131, %s147
      %p149 = scmp.eq.s32.totalorder %s33, 0
      %p150 = por %p148, %p149
      %s152 = sadd.s32 %s151, 1
      %p155 = scmp.eq.s32.totalorder %s27, 7
      %p156 = scmp.ne.s32.totalorder %s151, %s153
      %p157 = scmp.eq.s32.totalorder %s27, 0
      %p158 = por %p156, %p157
      %p159 = scmp.ne.s32.totalorder %s151, %s153
      %p160 = scmp.eq.s32.totalorder %s32, 7
      %p161 = por %p159, %p160
      %p162 = scmp.ne.s32.totalorder %s153, %s154
      %p163 = scmp.eq.s32.totalorder %s32, 0
      %p164 = por %p162, %p163
      %p165 = scmp.ne.s32.totalorder %s153, %s154
      %p166 = scmp.eq.s32.totalorder %s33, 7
      %p167 = por %p165, %p166
      %p169 = scmp.ne.s32.totalorder %s154, %s168
      %p170 = scmp.eq.s32.totalorder %s33, 0
      %p171 = por %p169, %p170
      %s173 = sadd.s32 %s172, 1
      %p176 = scmp.eq.s32.totalorder %s27, 7
      %p177 = scmp.ne.s32.totalorder %s172, %s174
      %p178 = scmp.eq.s32.totalorder %s27, 0
      %p179 = por %p177, %p178
      %p180 = scmp.ne.s32.totalorder %s172, %s174
      %p181 = scmp.eq.s32.totalorder %s32, 7
      %p182 = por %p180, %p181
      %p183 = scmp.ne.s32.totalorder %s174, %s175
      %p184 = scmp.eq.s32.totalorder %s32, 0
      %p185 = por %p183, %p184
      %p186 = scmp.ne.s32.totalorder %s174, %s175
      %p187 = scmp.eq.s32.totalorder %s33, 7
      %p188 = por %p186, %p187
      %p190 = scmp.ne.s32.totalorder %s175, %s189
      %p191 = scmp.eq.s32.totalorder %s33, 0
      %p192 = por %p190, %p191
      %s194 = sadd.s32 %s193, 1
      %p197 = scmp.eq.s32.totalorder %s27, 7
      %p198 = scmp.ne.s32.totalorder %s193, %s195
      %p199 = scmp.eq.s32.totalorder %s27, 0
      %p200 = por %p198, %p199
      %p201 = scmp.ne.s32.totalorder %s193, %s195
      %p202 = scmp.eq.s32.totalorder %s32, 7
      %p203 = por %p201, %p202
      %p204 = scmp.ne.s32.totalorder %s195, %s196
      %p205 = scmp.eq.s32.totalorder %s32, 0
      %p206 = por %p204, %p205
      %p207 = scmp.ne.s32.totalorder %s195, %s196
      %p208 = scmp.eq.s32.totalorder %s33, 7
      %p209 = por %p207, %p208
      %p211 = scmp.ne.s32.totalorder %s196, %s210
      %p212 = scmp.eq.s32.totalorder %s33, 0
      %p213 = por %p211, %p212
      %s215 = sadd.s32 %s214, 1
      %p218 = scmp.eq.s32.totalorder %s27, 7
      %p219 = scmp.ne.s32.totalorder %s214, %s216
      %p220 = scmp.eq.s32.totalorder %s27, 0
      %p221 = por %p219, %p220
      %p222 = scmp.ne.s32.totalorder %s214, %s216
      %p223 = scmp.eq.s32.totalorder %s32, 7
      %p224 = por %p222, %p223
      %p225 = scmp.ne.s32.totalorder %s216, %s217
      %p226 = scmp.eq.s32.totalorder %s32, 0
      %p227 = por %p225, %p226
      %p228 = scmp.ne.s32.totalorder %s216, %s217
      %p229 = scmp.eq.s32.totalorder %s33, 7
      %p230 = por %p228, %p229
      %p232 = scmp.ne.s32.totalorder %s217, %s231
      %p233 = scmp.eq.s32.totalorder %s33, 0
      %p234 = por %p232, %p233
      %s236 = sadd.s32 %s235, 1
      %p239 = scmp.eq.s32.totalorder %s27, 7
      %p240 = scmp.ne.s32.totalorder %s235, %s237
      %p241 = scmp.eq.s32.totalorder %s27, 0
      %p242 = por %p240, %p241
      %p243 = scmp.ne.s32.totalorder %s235, %s237
      %p244 = scmp.eq.s32.totalorder %s32, 7
      %p245 = por %p243, %p244
      %p246 = scmp.ne.s32.totalorder %s237, %s238
      %p247 = scmp.eq.s32.totalorder %s32, 0
      %p248 = por %p246, %p247
      %p249 = scmp.ne.s32.totalorder %s237, %s238
      %p250 = scmp.eq.s32.totalorder %s33, 7
      %p251 = por %p249, %p250
      %p253 = scmp.ne.s32.totalorder %s238, %s252
      %p254 = scmp.eq.s32.totalorder %s33, 0
      %p255 = por %p253, %p254
      %s257 = sadd.s32 %s256, 1
      %p260 = scmp.eq.s32.totalorder %s27, 7
      %p261 = scmp.ne.s32.totalorder %s256, %s258
      %p262 = scmp.eq.s32.totalorder %s27, 0
      %p263 = por %p261, %p262
      %p264 = scmp.ne.s32.totalorder %s256, %s258
      %p265 = scmp.eq.s32.totalorder %s32, 7
      %p266 = por %p264, %p265
      %p267 = scmp.ne.s32.totalorder %s258, %s259
      %p268 = scmp.eq.s32.totalorder %s32, 0
      %p269 = por %p267, %p268
      %p270 = scmp.ne.s32.totalorder %s258, %s259
      %p271 = scmp.eq.s32.totalorder %s33, 7
      %p272 = por %p270, %p271
      %p274 = scmp.ne.s32.totalorder %s259, %s273
      %p275 = scmp.eq.s32.totalorder %s33, 0
      %p276 = por %p274, %p275
      %s278 = sadd.s32 %s277, 1
      %p281 = scmp.eq.s32.totalorder %s27, 7
      %p282 = scmp.ne.s32.totalorder %s277, %s279
      %p283 = scmp.eq.s32.totalorder %s27, 0
      %p284 = por %p282, %p283
      %p285 = scmp.ne.s32.totalorder %s277, %s279
      %p286 = scmp.eq.s32.totalorder %s32, 7
      %p287 = por %p285, %p286
      %p288 = scmp.ne.s32.totalorder %s279, %s280
      %p289 = scmp.eq.s32.totalorder %s32, 0
      %p290 = por %p288, %p289
      %p291 = scmp.ne.s32.totalorder %s279, %s280
      %p292 = scmp.eq.s32.totalorder %s33, 7
      %p293 = por %p291, %p292
      %p295 = scmp.ne.s32.totalorder %s280, %s294
      %p296 = scmp.eq.s32.totalorder %s33, 0
      %p297 = por %p295, %p296
      %s299 = sadd.s32 %s298, 1
      %p302 = scmp.eq.s32.totalorder %s27, 7
      %p303 = scmp.ne.s32.totalorder %s298, %s300
      %p304 = scmp.eq.s32.totalorder %s27, 0
      %p305 = por %p303, %p304
      %p306 = scmp.ne.s32.totalorder %s298, %s300
      %p307 = scmp.eq.s32.totalorder %s32, 7
      %p308 = por %p306, %p307
      %p309 = scmp.ne.s32.totalorder %s300, %s301
      %p310 = scmp.eq.s32.totalorder %s32, 0
      %p311 = por %p309, %p310
      %p312 = scmp.ne.s32.totalorder %s300, %s301
      %p313 = scmp.eq.s32.totalorder %s33, 7
      %p314 = por %p312, %p313
      %p316 = scmp.ne.s32.totalorder %s301, %s315
      %p317 = scmp.eq.s32.totalorder %s33, 0
      %p318 = por %p316, %p317
      %s320 = sadd.s32 %s319, 1
      %p323 = scmp.eq.s32.totalorder %s27, 7
      %p324 = scmp.ne.s32.totalorder %s319, %s321
      %p325 = scmp.eq.s32.totalorder %s27, 0
      %p326 = por %p324, %p325
      %p327 = scmp.ne.s32.totalorder %s319, %s321
      %p328 = scmp.eq.s32.totalorder %s32, 7
      %p329 = por %p327, %p328
      %p330 = scmp.ne.s32.totalorder %s321, %s322
      %p331 = scmp.eq.s32.totalorder %s32, 0
      %p332 = por %p330, %p331
      %p333 = scmp.ne.s32.totalorder %s321, %s322
      %p334 = scmp.eq.s32.totalorder %s33, 7
      %p335 = por %p333, %p334
      %p337 = scmp.ne.s32.totalorder %s322, %s336
      %p338 = scmp.eq.s32.totalorder %s33, 0
      %p339 = por %p337, %p338
      %s341 = sadd.s32 %s340, 1
      %p344 = scmp.eq.s32.totalorder %s27, 7
      %p345 = scmp.ne.s32.totalorder %s340, %s342
      %p346 = scmp.eq.s32.totalorder %s27, 0
      %p347 = por %p345, %p346
      %p348 = scmp.ne.s32.totalorder %s340, %s342
      %p349 = scmp.eq.s32.totalorder %s32, 7
      %p350 = por %p348, %p349
      %p351 = scmp.ne.s32.totalorder %s342, %s343
      %p352 = scmp.eq.s32.totalorder %s32, 0
      %p353 = por %p351, %p352
      %p354 = scmp.ne.s32.totalorder %s342, %s343
      %p355 = scmp.eq.s32.totalorder %s33, 7
      %p356 = por %p354, %p355
      %p358 = scmp.ne.s32.totalorder %s343, %s357
      %p359 = scmp.eq.s32.totalorder %s33, 0
      %p360 = por %p358, %p359
      %s362 = sadd.s32 %s361, 1
      %p365 = scmp.eq.s32.totalorder %s27, 7
      %p366 = scmp.ne.s32.totalorder %s361, %s363
      %p367 = scmp.eq.s32.totalorder %s27, 0
      %p368 = por %p366, %p367
      %p369 = scmp.ne.s32.totalorder %s361, %s363
      %p370 = scmp.eq.s32.totalorder %s32, 7
      %p371 = por %p369, %p370
      %p372 = scmp.ne.s32.totalorder %s363, %s364
      %p373 = scmp.eq.s32.totalorder %s32, 0
      %p374 = por %p372, %p373
      %p375 = scmp.ne.s32.totalorder %s363, %s364
      %p376 = scmp.eq.s32.totalorder %s33, 7
      %p377 = por %p375, %p376
      %p379 = scmp.ne.s32.totalorder %s364, %s378
      %p380 = scmp.eq.s32.totalorder %s33, 0
      %p381 = por %p379, %p380
      %s383 = sadd.s32 %s382, 1
      %p386 = scmp.eq.s32.totalorder %s27, 7
      %p387 = scmp.ne.s32.totalorder %s382, %s384
      %p388 = scmp.eq.s32.totalorder %s27, 0
      %p389 = por %p387, %p388
      %p390 = scmp.ne.s32.totalorder %s382, %s384
      %p391 = scmp.eq.s32.totalorder %s32, 7
      %p392 = por %p390, %p391
      %p393 = scmp.ne.s32.totalorder %s384, %s385
      %p394 = scmp.eq.s32.totalorder %s32, 0
      %p395 = por %p393, %p394
      %p396 = scmp.ne.s32.totalorder %s384, %s385
      %p397 = scmp.eq.s32.totalorder %s33, 7
      %p398 = por %p396, %p397
      %p400 = scmp.ne.s32.totalorder %s385, %s399
      %p401 = scmp.eq.s32.totalorder %s33, 0
      %p402 = por %p400, %p401
      %s404 = sadd.s32 %s403, 1
      %p407 = scmp.eq.s32.totalorder %s27, 7
      %p408 = scmp.ne.s32.totalorder %s403, %s405
      %p409 = scmp.eq.s32.totalorder %s27, 0
      %p410 = por %p408, %p409
      %p411 = scmp.ne.s32.totalorder %s403, %s405
      %p412 = scmp.eq.s32.totalorder %s32, 7
      %p413 = por %p411, %p412
      %p414 = scmp.ne.s32.totalorder %s405, %s406
      %p415 = scmp.eq.s32.totalorder %s32, 0
      %p416 = por %p414, %p415
      %p417 = scmp.ne.s32.totalorder %s405, %s406
      %p418 = scmp.eq.s32.totalorder %s33, 7
      %p419 = por %p417, %p418
      %p421 = scmp.ne.s32.totalorder %s406, %s420
      %p422 = scmp.eq.s32.totalorder %s33, 0
      %p423 = por %p421, %p422
      %s425 = sadd.s32 %s424, 1
      %p428 = scmp.eq.s32.totalorder %s27, 7
      %p429 = scmp.ne.s32.totalorder %s424, %s426
      %p430 = scmp.eq.s32.totalorder %s27, 0
      %p431 = por %p429, %p430
      %p432 = scmp.ne.s32.totalorder %s424, %s426
      %p433 = scmp.eq.s32.totalorder %s32, 7
      %p434 = por %p432, %p433
      %p435 = scmp.ne.s32.totalorder %s426, %s427
      %p436 = scmp.eq.s32.totalorder %s32, 0
      %p437 = por %p435, %p436
      %p438 = scmp.ne.s32.totalorder %s426, %s427
      %p439 = scmp.eq.s32.totalorder %s33, 7
      %p440 = por %p438, %p439
      %p442 = scmp.ne.s32.totalorder %s427, %s441
      %p443 = scmp.eq.s32.totalorder %s33, 0
      %p444 = por %p442, %p443
      %s445 = ssub.s32 %s34, %s46
      %p446 = scmp.eq.s32.totalorder %s445, 0
      %s448 = sadd.s32 %s447, 1
      %s449 = scalar_select %p446, %s447, %s448
      %p452 = pneg %p446
      %p453 = scmp.eq.s32.totalorder %s27, 7
      %p454 = por %p452, %p453
      %p455 = scmp.ne.s32.totalorder %s447, %s450
      %p456 = scmp.eq.s32.totalorder %s27, 0
      %p457 = por %p455, %p456
      %p458 = scmp.ne.s32.totalorder %s447, %s450
      %p459 = scmp.eq.s32.totalorder %s32, 7
      %p460 = por %p458, %p459
      %p461 = scmp.ne.s32.totalorder %s450, %s451
      %p462 = scmp.eq.s32.totalorder %s32, 0
      %p463 = por %p461, %p462
      %p464 = scmp.ne.s32.totalorder %s450, %s451
      %p465 = scmp.eq.s32.totalorder %s33, 7
      %p466 = por %p464, %p465
      %p468 = scmp.ne.s32.totalorder %s451, %s467
      %p469 = scmp.eq.s32.totalorder %s33, 0
      %p470 = por %p468, %p469
      %p471 = scmp.le.s32.totalorder 1, %s27
      %p472 = scmp.lt.s32.totalorder %s27, 9
      %p473 = pnand %p471, %p472
      %p474 = pneg %p473
      // Predicated region
      $region9: #{tpu_custom_call.1} parent=5 // pred_check
        _
      $region10: #{tpu_custom_call.1} parent=5 // pred_check_branch
        %476 = sbr.rel (%p473) target = $region12
      $region11: #{tpu_custom_call.1} parent=5 // pred_region
        %s477 = ssub.s32 %s27, 1
        // Predicated region
        $region13: #{tpu_custom_call.1} parent=11 // pred_check
          %p478 = pneg %p164
        $region14: #{tpu_custom_call.1} parent=11 // pred_check_branch
          %480 = sbr.rel (%p478) target = $region16
        $region15: #{tpu_custom_call.1} parent=11 // pred_region
          _
        $region16: #{tpu_custom_call.1} parent=11 // pred_fallthru
          _
        // Predicated region
        $region17: #{tpu_custom_call.1} parent=11 // pred_check
          %p481 = pneg %p185
        $region18: #{tpu_custom_call.1} parent=11 // pred_check_branch
          %483 = sbr.rel (%p481) target = $region20
        $region19: #{tpu_custom_call.1} parent=11 // pred_region
          _
        $region20: #{tpu_custom_call.1} parent=11 // pred_fallthru
          _
        // Predicated region
        $region21: #{tpu_custom_call.1} parent=11 // pred_check
          %p484 = pneg %p206
        $region22: #{tpu_custom_call.1} parent=11 // pred_check_branch
          %486 = sbr.rel (%p484) target = $region24
        $region23: #{tpu_custom_call.1} parent=11 // pred_region
          _
        $region24: #{tpu_custom_call.1} parent=11 // pred_fallthru
          _
        // Predicated region
        $region25: #{tpu_custom_call.1} parent=11 // pred_check
          %p487 = pneg %p227
        $region26: #{tpu_custom_call.1} parent=11 // pred_check_branch
          %489 = sbr.rel (%p487) target = $region28
        $region27: #{tpu_custom_call.1} parent=11 // pred_region
          _
        $region28: #{tpu_custom_call.1} parent=11 // pred_fallthru
          _
        // Predicated region
        $region29: #{tpu_custom_call.1} parent=11 // pred_check
          %p490 = pneg %p248
        $region30: #{tpu_custom_call.1} parent=11 // pred_check_branch
          %492 = sbr.rel (%p490) target = $region32
        $region31: #{tpu_custom_call.1} parent=11 // pred_region
          _
        $region32: #{tpu_custom_call.1} parent=11 // pred_fallthru
          _
        // Predicated region
        $region33: #{tpu_custom_call.1} parent=11 // pred_check
          %p493 = pneg %p269
        $region34: #{tpu_custom_call.1} parent=11 // pred_check_branch
          %495 = sbr.rel (%p493) target = $region36
        $region35: #{tpu_custom_call.1} parent=11 // pred_region
          _
        $region36: #{tpu_custom_call.1} parent=11 // pred_fallthru
          _
        // Predicated region
        $region37: #{tpu_custom_call.1} parent=11 // pred_check
          %p496 = pneg %p290
        $region38: #{tpu_custom_call.1} parent=11 // pred_check_branch
          %498 = sbr.rel (%p496) target = $region40
        $region39: #{tpu_custom_call.1} parent=11 // pred_region
          _
        $region40: #{tpu_custom_call.1} parent=11 // pred_fallthru
          _
        // Predicated region
        $region41: #{tpu_custom_call.1} parent=11 // pred_check
          %p499 = pneg %p311
        $region42: #{tpu_custom_call.1} parent=11 // pred_check_branch
          %501 = sbr.rel (%p499) target = $region44
        $region43: #{tpu_custom_call.1} parent=11 // pred_region
          _
        $region44: #{tpu_custom_call.1} parent=11 // pred_fallthru
          _
        // Predicated region
        $region45: #{tpu_custom_call.1} parent=11 // pred_check
          %p502 = pneg %p332
        $region46: #{tpu_custom_call.1} parent=11 // pred_check_branch
          %504 = sbr.rel (%p502) target = $region48
        $region47: #{tpu_custom_call.1} parent=11 // pred_region
          _
        $region48: #{tpu_custom_call.1} parent=11 // pred_fallthru
          _
        // Predicated region
        $region49: #{tpu_custom_call.1} parent=11 // pred_check
          %p505 = pneg %p353
        $region50: #{tpu_custom_call.1} parent=11 // pred_check_branch
          %507 = sbr.rel (%p505) target = $region52
        $region51: #{tpu_custom_call.1} parent=11 // pred_region
          _
        $region52: #{tpu_custom_call.1} parent=11 // pred_fallthru
          _
        // Predicated region
        $region53: #{tpu_custom_call.1} parent=11 // pred_check
          %p508 = pneg %p374
        $region54: #{tpu_custom_call.1} parent=11 // pred_check_branch
          %510 = sbr.rel (%p508) target = $region56
        $region55: #{tpu_custom_call.1} parent=11 // pred_region
          _
        $region56: #{tpu_custom_call.1} parent=11 // pred_fallthru
          _
        // Predicated region
        $region57: #{tpu_custom_call.1} parent=11 // pred_check
          %p511 = pneg %p395
        $region58: #{tpu_custom_call.1} parent=11 // pred_check_branch
          %513 = sbr.rel (%p511) target = $region60
        $region59: #{tpu_custom_call.1} parent=11 // pred_region
          _
        $region60: #{tpu_custom_call.1} parent=11 // pred_fallthru
          _
        // Predicated region
        $region61: #{tpu_custom_call.1} parent=11 // pred_check
          %p514 = pneg %p416
        $region62: #{tpu_custom_call.1} parent=11 // pred_check_branch
          %516 = sbr.rel (%p514) target = $region64
        $region63: #{tpu_custom_call.1} parent=11 // pred_region
          _
        $region64: #{tpu_custom_call.1} parent=11 // pred_fallthru
          _
        // Predicated region
        $region65: #{tpu_custom_call.1} parent=11 // pred_check
          %p517 = pneg %p437
        $region66: #{tpu_custom_call.1} parent=11 // pred_check_branch
          %519 = sbr.rel (%p517) target = $region68
        $region67: #{tpu_custom_call.1} parent=11 // pred_region
          _
        $region68: #{tpu_custom_call.1} parent=11 // pred_fallthru
          _
      $region12: #{tpu_custom_call.1} parent=5 // pred_fallthru
        _
      %p520 = scmp.lt.s32.totalorder %s27, 8
      // Predicated region
      $region69: #{tpu_custom_call.1} parent=5 // pred_check
        %p521 = pneg %p520
      $region70: #{tpu_custom_call.1} parent=5 // pred_check_branch
        %523 = sbr.rel (%p521) target = $region72
      $region71: #{tpu_custom_call.1} parent=5 // pred_region
        // Predicated region
        $region73: #{tpu_custom_call.1} parent=71 // pred_check
          %p524 = pneg %p59
        $region74: #{tpu_custom_call.1} parent=71 // pred_check_branch
          %526 = sbr.rel (%p524) target = $region76
        $region75: #{tpu_custom_call.1} parent=71 // pred_region
          %p527 = scmp.lt.s32.totalorder %s34, 1
          %s528 = scalar_select %p527, %s34, 1
          %s529 = smul.addr %s528, 8
          %s530 = scalar_lea.vmem %s0, %s529
        $region76: #{tpu_custom_call.1} parent=71 // pred_fallthru
          _
        // Predicated region
        $region77: #{tpu_custom_call.1} parent=71 // pred_check
          %p531 = pneg %p85
        $region78: #{tpu_custom_call.1} parent=71 // pred_check_branch
          %533 = sbr.rel (%p531) target = $region80
        $region79: #{tpu_custom_call.1} parent=71 // pred_region
          %p534 = scmp.lt.s32.totalorder %s34, 1
          %s535 = scalar_select %p534, %s34, 1
          %s536 = smul.addr %s535, 8
          %s537 = scalar_lea.vmem %s1, %s536
        $region80: #{tpu_custom_call.1} parent=71 // pred_fallthru
          _
        // Predicated region
        $region81: #{tpu_custom_call.1} parent=71 // pred_check
          %p538 = pneg %p111
        $region82: #{tpu_custom_call.1} parent=71 // pred_check_branch
          %540 = sbr.rel (%p538) target = $region84
        $region83: #{tpu_custom_call.1} parent=71 // pred_region
          %p541 = scmp.lt.s32.totalorder %s34, 1
          %s542 = scalar_select %p541, %s34, 1
          %s543 = smul.addr %s542, 8
          %s544 = scalar_lea.vmem %s2, %s543
        $region84: #{tpu_custom_call.1} parent=71 // pred_fallthru
          _
        // Predicated region
        $region85: #{tpu_custom_call.1} parent=71 // pred_check
          %p545 = pneg %p137
        $region86: #{tpu_custom_call.1} parent=71 // pred_check_branch
          %547 = sbr.rel (%p545) target = $region88
        $region87: #{tpu_custom_call.1} parent=71 // pred_region
          %p548 = scmp.lt.s32.totalorder %s34, 1
          %s549 = scalar_select %p548, %s34, 1
          %s550 = smul.addr %s549, 8
          %s551 = scalar_lea.vmem %s3, %s550
        $region88: #{tpu_custom_call.1} parent=71 // pred_fallthru
          _
      $region72: #{tpu_custom_call.1} parent=5 // pred_fallthru
        _
      %p552 = scmp.le.s32.totalorder 1, %s27
      %p553 = scmp.lt.s32.totalorder %s27, 9
      %p554 = pnand %p552, %p553
      %p555 = pneg %p554
      // Predicated region
      $region89: #{tpu_custom_call.1} parent=5 // pred_check
        _
      $region90: #{tpu_custom_call.1} parent=5 // pred_check_branch
        %557 = sbr.rel (%p554) target = $region92
      $region91: #{tpu_custom_call.1} parent=5 // pred_region
        %s558 = ssub.s32 %s27, 1
        %p559 = scmp.lt.s32.totalorder %s36, 1
        %s560 = scalar_select %p559, %s36, 1
        %s561 = smul.addr %s560, 8
        %s562 = scalar_lea.vmem %s0, %s561
        %p563 = pneg %p65
        %p564 = pneg %p62
        %p565 = scmp.lt.s32.totalorder %s36, 1
        %s566 = scalar_select %p565, %s36, 1
        %s567 = smul.addr %s566, 8
        %s568 = scalar_lea.vmem %s1, %s567
        %p569 = pneg %p91
        %p570 = pneg %p88
        %p571 = scmp.lt.s32.totalorder %s36, 1
        %s572 = scalar_select %p571, %s36, 1
        %s573 = smul.addr %s572, 8
        %s574 = scalar_lea.vmem %s2, %s573
        %p575 = pneg %p117
        %p576 = pneg %p114
        %p577 = scmp.lt.s32.totalorder %s36, 1
        %s578 = scalar_select %p577, %s36, 1
        %s579 = smul.addr %s578, 8
        %s580 = scalar_lea.vmem %s3, %s579
        %p581 = pneg %p143
        %p582 = pneg %p140
        %p583 = pneg %p164
        %p584 = pneg %p161
        %p585 = pneg %p185
        %p586 = pneg %p182
        %p587 = pneg %p206
        %p588 = pneg %p203
        %p589 = pneg %p227
        %p590 = pneg %p224
        %p591 = pneg %p248
        %p592 = pneg %p245
        %p593 = pneg %p269
        %p594 = pneg %p266
        %p595 = pneg %p290
        %p596 = pneg %p287
        %p597 = pneg %p311
        %p598 = pneg %p308
        %p599 = pneg %p332
        %p600 = pneg %p329
        %p601 = pneg %p353
        %p602 = pneg %p350
        %p603 = pneg %p374
        %p604 = pneg %p371
        %p605 = pneg %p395
        %p606 = pneg %p392
        %p607 = pneg %p416
        %p608 = pneg %p413
        %p609 = pneg %p437
        %p610 = pneg %p434
        %p611 = pneg %p463
        %p612 = pneg %p460
        %s613 = sand.u32 %s450, 1
        %s614 = scalar_lea.sflag [#allocation4], %s613
        %s615 = sand.u32 %s450, 1
        %s616 = smul.addr %s615, 8
        %s617 = scalar_lea.vmem [#allocation3], %s616
        %p618 = scmp.lt.s32.totalorder %s36, 1
        %s619 = scalar_select %p618, %s36, 1
        %s620 = smul.addr %s619, 8
        %s621 = scalar_lea.vmem %s0, %s620
        %p622 = scmp.lt.s32.totalorder %s36, 1
        %s623 = scalar_select %p622, %s36, 1
        %s624 = smul.addr %s623, 8
        %s625 = scalar_lea.vmem %s1, %s624
        %p626 = scmp.lt.s32.totalorder %s36, 1
        %s627 = scalar_select %p626, %s36, 1
        %s628 = smul.addr %s627, 8
        %s629 = scalar_lea.vmem %s2, %s628
        %p630 = scmp.lt.s32.totalorder %s36, 1
        %s631 = scalar_select %p630, %s36, 1
        %s632 = smul.addr %s631, 8
        %s633 = scalar_lea.vmem %s3, %s632
        %v634 = vld [vmem:[%s621] sm:$0xff]
        %v635 = vld [vmem:[%s625] sm:$0xff]
        %v636 = vld [vmem:[%s629] sm:$0xff]
        %v637 = vld [vmem:[%s633] sm:$0xff]
        %s638 = smul.u32 %s37, 32
        %s639 = scalar_lea.vmem %s4, %s638
        %v640 = vld [vmem:[%s639] sm:$0xff]
        %v641 = vld [vmem:[%s639 + $0x8] sm:$0xff]
        %v642 = vld [vmem:[%s639 + $0x10] sm:$0xff]
        %v643 = vld [vmem:[%s639 + $0x18] sm:$0xff]
        %s644 = scalar_lea.vmem %s5, %s37
        %v645 = vld [vmem:[%s644] sm:$0x1]
        %v647 = vlaneseq
        %v648 = vshrl.u32 %v647, 7
        %v649 = vsub.s32 0, %v648
        %v650 = vrot.slane %v645, %v649
        %vm652 = vcmask 261120
        %v654 = vsel %vm652, %v634, 0
        %656 = vmatprep.subr.mxu0 0.0
        %657 = vmatpush1.msra.mxu0 %v640
        %658 = vmatprep.subr.mxu0 0.0
        %659 = vmatpush1.msra.mxu0 %v641
        %660 = vmatprep.subr.mxu0 0.0
        %661 = vmatpush1.msra.mxu0 %v642
        %662 = vmatprep.subr.mxu0 0.0
        %663 = vmatpush1.msra.mxu0 %v643
        %664 = vmatprep.subr.mxu0 0.0
        %665 = vmatpush1.msra.mxu0 0.0
        %666 = vmatprep.subr.mxu0 0.0
        %667 = vmatpush1.msra.mxu0 0.0
        %668 = vmatprep.subr.mxu0 0.0
        %669 = vmatpush1.msra.mxu0 0.0
        %670 = vmatprep.subr.mxu0 0.0
        %671 = vmatpush1.msra.mxu0 0.0
        %672 = vmatprep.subr.mxu0 0.0
        %673 = vmatpush1.msra.mxu0 0.0
        %674 = vmatprep.subr.mxu0 0.0
        %675 = vmatpush1.msra.mxu0 0.0
        %676 = vmatprep.subr.mxu0 0.0
        %677 = vmatpush1.msra.mxu0 0.0
        %678 = vmatprep.subr.mxu0 0.0
        %679 = vmatpush1.msra.mxu0 0.0
        %680 = vmatprep.subr.mxu0 0.0
        %681 = vmatpush1.msra.mxu0 0.0
        %682 = vmatprep.subr.mxu0 0.0
        %683 = vmatpush1.msra.mxu0 0.0
        %684 = vmatprep.subr.mxu0 0.0
        %685 = vmatpush1.msra.mxu0 0.0
        %686 = vmatprep.subr.mxu0 0.0
        %687 = vmatpush1.msra.mxu0 0.0
        %688 = vmatprep.subr.mxu0 0.0
        %689 = vmatpush1.msra.mxu0 0.0
        %690 = vmatprep.subr.mxu0 0.0
        %691 = vmatpush1.msra.mxu0 0.0
        %692 = vmatprep.subr.mxu0 0.0
        %693 = vmatpush1.msra.mxu0 0.0
        %694 = vmatprep.subr.mxu0 0.0
        %695 = vmatpush1.msra.mxu0 0.0
        %696 = vmatprep.subr.mxu0 0.0
        %697 = vmatpush1.msra.mxu0 0.0
        %698 = vmatprep.subr.mxu0 0.0
        %699 = vmatpush1.msra.mxu0 0.0
        %700 = vmatprep.subr.mxu0 0.0
        %701 = vmatpush1.msra.mxu0 0.0
        %702 = vmatprep.subr.mxu0 0.0
        %703 = vmatpush1.msra.mxu0 0.0
        %704 = vmatprep.subr.mxu0 0.0
        %705 = vmatpush1.msra.mxu0 0.0
        %706 = vmatprep.subr.mxu0 0.0
        %707 = vmatpush1.msra.mxu0 0.0
        %708 = vmatprep.subr.mxu0 0.0
        %709 = vmatpush1.msra.mxu0 0.0
        %710 = vmatprep.subr.mxu0 0.0
        %711 = vmatpush1.msra.mxu0 0.0
        %712 = vmatprep.subr.mxu0 0.0
        %713 = vmatpush1.msra.mxu0 0.0
        %714 = vmatprep.subr.mxu0 0.0
        %715 = vmatpush1.msra.mxu0 0.0
        %716 = vmatprep.subr.mxu0 0.0
        %717 = vmatpush1.msra.mxu0 0.0
        %718 = vmatprep.subr.mxu0 0.0
        %719 = vmatpush1.msra.mxu0 0.0
        %720 = vmatprep.mubr.f32.mxu0 0.0
        %721 = vmatmul.mubr.f32.gmra.mrb[0].mxu0 %v654
        %v722 = vpop.f32.mrb[0].mxu0
        %v723 = vadd.f32 %v650, %v722
        %v724 = vpop.f32.mrb[0].mxu0
        %725 = vdwg.mxu0
        %s726 = scalar_lea.vmem %s6, %s638
        %v727 = vld [vmem:[%s726] sm:$0xff]
        %v728 = vld [vmem:[%s726 + $0x8] sm:$0xff]
        %v729 = vld [vmem:[%s726 + $0x10] sm:$0xff]
        %v730 = vld [vmem:[%s726 + $0x18] sm:$0xff]
        %s731 = scalar_lea.vmem %s7, %s37
        %v732 = vld [vmem:[%s731] sm:$0x1]
        %v734 = vlaneseq
        %v735 = vshrl.u32 %v734, 7
        %v736 = vsub.s32 0, %v735
        %v737 = vrot.slane %v732, %v736
        %v740 = vsel %vm652, %v635, 0
        %742 = vmatprep.subr.mxu0 0.0
        %743 = vmatpush1.msra.mxu0 %v727
        %744 = vmatprep.subr.mxu0 0.0
        %745 = vmatpush1.msra.mxu0 %v728
        %746 = vmatprep.subr.mxu0 0.0
        %747 = vmatpush1.msra.mxu0 %v729
        %748 = vmatprep.subr.mxu0 0.0
        %749 = vmatpush1.msra.mxu0 %v730
        %750 = vmatprep.subr.mxu0 0.0
        %751 = vmatpush1.msra.mxu0 0.0
        %752 = vmatprep.subr.mxu0 0.0
        %753 = vmatpush1.msra.mxu0 0.0
        %754 = vmatprep.subr.mxu0 0.0
        %755 = vmatpush1.msra.mxu0 0.0
        %756 = vmatprep.subr.mxu0 0.0
        %757 = vmatpush1.msra.mxu0 0.0
        %758 = vmatprep.subr.mxu0 0.0
        %759 = vmatpush1.msra.mxu0 0.0
        %760 = vmatprep.subr.mxu0 0.0
        %761 = vmatpush1.msra.mxu0 0.0
        %762 = vmatprep.subr.mxu0 0.0
        %763 = vmatpush1.msra.mxu0 0.0
        %764 = vmatprep.subr.mxu0 0.0
        %765 = vmatpush1.msra.mxu0 0.0
        %766 = vmatprep.subr.mxu0 0.0
        %767 = vmatpush1.msra.mxu0 0.0
        %768 = vmatprep.subr.mxu0 0.0
        %769 = vmatpush1.msra.mxu0 0.0
        %770 = vmatprep.subr.mxu0 0.0
        %771 = vmatpush1.msra.mxu0 0.0
        %772 = vmatprep.subr.mxu0 0.0
        %773 = vmatpush1.msra.mxu0 0.0
        %774 = vmatprep.subr.mxu0 0.0
        %775 = vmatpush1.msra.mxu0 0.0
        %776 = vmatprep.subr.mxu0 0.0
        %777 = vmatpush1.msra.mxu0 0.0
        %778 = vmatprep.subr.mxu0 0.0
        %779 = vmatpush1.msra.mxu0 0.0
        %780 = vmatprep.subr.mxu0 0.0
        %781 = vmatpush1.msra.mxu0 0.0
        %782 = vmatprep.subr.mxu0 0.0
        %783 = vmatpush1.msra.mxu0 0.0
        %784 = vmatprep.subr.mxu0 0.0
        %785 = vmatpush1.msra.mxu0 0.0
        %786 = vmatprep.subr.mxu0 0.0
        %787 = vmatpush1.msra.mxu0 0.0
        %788 = vmatprep.subr.mxu0 0.0
        %789 = vmatpush1.msra.mxu0 0.0
        %790 = vmatprep.subr.mxu0 0.0
        %791 = vmatpush1.msra.mxu0 0.0
        %792 = vmatprep.subr.mxu0 0.0
        %793 = vmatpush1.msra.mxu0 0.0
        %794 = vmatprep.subr.mxu0 0.0
        %795 = vmatpush1.msra.mxu0 0.0
        %796 = vmatprep.subr.mxu0 0.0
        %797 = vmatpush1.msra.mxu0 0.0
        %798 = vmatprep.subr.mxu0 0.0
        %799 = vmatpush1.msra.mxu0 0.0
        %800 = vmatprep.subr.mxu0 0.0
        %801 = vmatpush1.msra.mxu0 0.0
        %802 = vmatprep.subr.mxu0 0.0
        %803 = vmatpush1.msra.mxu0 0.0
        %804 = vmatprep.subr.mxu0 0.0
        %805 = vmatpush1.msra.mxu0 0.0
        %806 = vmatprep.mubr.f32.mxu0 0.0
        %807 = vmatmul.mubr.f32.gmra.mrb[0].mxu0 %v740
        %v808 = vpop.f32.mrb[0].mxu0
        %v809 = vadd.f32 %v737, %v808
        %v810 = vpop.f32.mrb[0].mxu0
        %811 = vdwg.mxu0
        %s812 = scalar_lea.vmem %s8, %s638
        %v813 = vld [vmem:[%s812] sm:$0xff]
        %v814 = vld [vmem:[%s812 + $0x8] sm:$0xff]
        %v815 = vld [vmem:[%s812 + $0x10] sm:$0xff]
        %v816 = vld [vmem:[%s812 + $0x18] sm:$0xff]
        %s817 = scalar_lea.vmem %s9, %s37
        %v818 = vld [vmem:[%s817] sm:$0x1]
        %v820 = vlaneseq
        %v821 = vshrl.u32 %v820, 7
        %v822 = vsub.s32 0, %v821
        %v823 = vrot.slane %v818, %v822
        %v826 = vsel %vm652, %v636, 0
        %828 = vmatprep.subr.mxu0 0.0
        %829 = vmatpush1.msra.mxu0 %v813
        %830 = vmatprep.subr.mxu0 0.0
        %831 = vmatpush1.msra.mxu0 %v814
        %832 = vmatprep.subr.mxu0 0.0
        %833 = vmatpush1.msra.mxu0 %v815
        %834 = vmatprep.subr.mxu0 0.0
        %835 = vmatpush1.msra.mxu0 %v816
        %836 = vmatprep.subr.mxu0 0.0
        %837 = vmatpush1.msra.mxu0 0.0
        %838 = vmatprep.subr.mxu0 0.0
        %839 = vmatpush1.msra.mxu0 0.0
        %840 = vmatprep.subr.mxu0 0.0
        %841 = vmatpush1.msra.mxu0 0.0
        %842 = vmatprep.subr.mxu0 0.0
        %843 = vmatpush1.msra.mxu0 0.0
        %844 = vmatprep.subr.mxu0 0.0
        %845 = vmatpush1.msra.mxu0 0.0
        %846 = vmatprep.subr.mxu0 0.0
        %847 = vmatpush1.msra.mxu0 0.0
        %848 = vmatprep.subr.mxu0 0.0
        %849 = vmatpush1.msra.mxu0 0.0
        %850 = vmatprep.subr.mxu0 0.0
        %851 = vmatpush1.msra.mxu0 0.0
        %852 = vmatprep.subr.mxu0 0.0
        %853 = vmatpush1.msra.mxu0 0.0
        %854 = vmatprep.subr.mxu0 0.0
        %855 = vmatpush1.msra.mxu0 0.0
        %856 = vmatprep.subr.mxu0 0.0
        %857 = vmatpush1.msra.mxu0 0.0
        %858 = vmatprep.subr.mxu0 0.0
        %859 = vmatpush1.msra.mxu0 0.0
        %860 = vmatprep.subr.mxu0 0.0
        %861 = vmatpush1.msra.mxu0 0.0
        %862 = vmatprep.subr.mxu0 0.0
        %863 = vmatpush1.msra.mxu0 0.0
        %864 = vmatprep.subr.mxu0 0.0
        %865 = vmatpush1.msra.mxu0 0.0
        %866 = vmatprep.subr.mxu0 0.0
        %867 = vmatpush1.msra.mxu0 0.0
        %868 = vmatprep.subr.mxu0 0.0
        %869 = vmatpush1.msra.mxu0 0.0
        %870 = vmatprep.subr.mxu0 0.0
        %871 = vmatpush1.msra.mxu0 0.0
        %872 = vmatprep.subr.mxu0 0.0
        %873 = vmatpush1.msra.mxu0 0.0
        %874 = vmatprep.subr.mxu0 0.0
        %875 = vmatpush1.msra.mxu0 0.0
        %876 = vmatprep.subr.mxu0 0.0
        %877 = vmatpush1.msra.mxu0 0.0
        %878 = vmatprep.subr.mxu0 0.0
        %879 = vmatpush1.msra.mxu0 0.0
        %880 = vmatprep.subr.mxu0 0.0
        %881 = vmatpush1.msra.mxu0 0.0
        %882 = vmatprep.subr.mxu0 0.0
        %883 = vmatpush1.msra.mxu0 0.0
        %884 = vmatprep.subr.mxu0 0.0
        %885 = vmatpush1.msra.mxu0 0.0
        %886 = vmatprep.subr.mxu0 0.0
        %887 = vmatpush1.msra.mxu0 0.0
        %888 = vmatprep.subr.mxu0 0.0
        %889 = vmatpush1.msra.mxu0 0.0
        %890 = vmatprep.subr.mxu0 0.0
        %891 = vmatpush1.msra.mxu0 0.0
        %892 = vmatprep.mubr.f32.mxu0 0.0
        %893 = vmatmul.mubr.f32.gmra.mrb[0].mxu0 %v826
        %v894 = vpop.f32.mrb[0].mxu0
        %v895 = vadd.f32 %v823, %v894
        %v896 = vpop.f32.mrb[0].mxu0
        %897 = vdwg.mxu0
        %vm898 = vcmask 64512
        %v900 = vsel %vm898, %v723, 0
        %v903 = vsel %vm898, %v809, 0
        %905 = vmatprep.subr.mxu0 0.0
        %906 = vmatpush1.xpose.msra.mxu0 %v903
        %907 = vmatprep.subr.mxu0 0.0
        %908 = vmatpush1.xpose.msra.mxu0 0.0
        %909 = vmatprep.subr.mxu0 0.0
        %910 = vmatpush1.xpose.msra.mxu0 0.0
        %911 = vmatprep.subr.mxu0 0.0
        %912 = vmatpush1.xpose.msra.mxu0 0.0
        %913 = vmatprep.subr.mxu0 0.0
        %914 = vmatpush1.xpose.msra.mxu0 0.0
        %915 = vmatprep.subr.mxu0 0.0
        %916 = vmatpush1.xpose.msra.mxu0 0.0
        %917 = vmatprep.subr.mxu0 0.0
        %918 = vmatpush1.xpose.msra.mxu0 0.0
        %919 = vmatprep.subr.mxu0 0.0
        %920 = vmatpush1.xpose.msra.mxu0 0.0
        %921 = vmatprep.subr.mxu0 0.0
        %922 = vmatpush1.xpose.msra.mxu0 0.0
        %923 = vmatprep.subr.mxu0 0.0
        %924 = vmatpush1.xpose.msra.mxu0 0.0
        %925 = vmatprep.subr.mxu0 0.0
        %926 = vmatpush1.xpose.msra.mxu0 0.0
        %927 = vmatprep.subr.mxu0 0.0
        %928 = vmatpush1.xpose.msra.mxu0 0.0
        %929 = vmatprep.subr.mxu0 0.0
        %930 = vmatpush1.xpose.msra.mxu0 0.0
        %931 = vmatprep.subr.mxu0 0.0
        %932 = vmatpush1.xpose.msra.mxu0 0.0
        %933 = vmatprep.subr.mxu0 0.0
        %934 = vmatpush1.xpose.msra.mxu0 0.0
        %935 = vmatprep.subr.mxu0 0.0
        %936 = vmatpush1.xpose.msra.mxu0 0.0
        %937 = vmatprep.subr.mxu0 0.0
        %938 = vmatpush1.xpose.msra.mxu0 0.0
        %939 = vmatprep.subr.mxu0 0.0
        %940 = vmatpush1.xpose.msra.mxu0 0.0
        %941 = vmatprep.subr.mxu0 0.0
        %942 = vmatpush1.xpose.msra.mxu0 0.0
        %943 = vmatprep.subr.mxu0 0.0
        %944 = vmatpush1.xpose.msra.mxu0 0.0
        %945 = vmatprep.subr.mxu0 0.0
        %946 = vmatpush1.xpose.msra.mxu0 0.0
        %947 = vmatprep.subr.mxu0 0.0
        %948 = vmatpush1.xpose.msra.mxu0 0.0
        %949 = vmatprep.subr.mxu0 0.0
        %950 = vmatpush1.xpose.msra.mxu0 0.0
        %951 = vmatprep.subr.mxu0 0.0
        %952 = vmatpush1.xpose.msra.mxu0 0.0
        %953 = vmatprep.subr.mxu0 0.0
        %954 = vmatpush1.xpose.msra.mxu0 0.0
        %955 = vmatprep.subr.mxu0 0.0
        %956 = vmatpush1.xpose.msra.mxu0 0.0
        %957 = vmatprep.subr.mxu0 0.0
        %958 = vmatpush1.xpose.msra.mxu0 0.0
        %959 = vmatprep.subr.mxu0 0.0
        %960 = vmatpush1.xpose.msra.mxu0 0.0
        %961 = vmatprep.subr.mxu0 0.0
        %962 = vmatpush1.xpose.msra.mxu0 0.0
        %963 = vmatprep.subr.mxu0 0.0
        %964 = vmatpush1.xpose.msra.mxu0 0.0
        %965 = vmatprep.subr.mxu0 0.0
        %966 = vmatpush1.xpose.msra.mxu0 0.0
        %967 = vmatprep.subr.mxu0 0.0
        %968 = vmatpush1.xpose.msra.mxu0 0.0
        %969 = vmatprep.mubr.f32.mxu0 0.0
        %970 = vmatmul.mubr.f32.gmra.mrb[0].mxu0 %v900
        %v971 = vpop.f32.mrb[0].mxu0
        %v972 = vadd.f32 0.0, %v971
        %v973 = vpop.f32.mrb[0].mxu0
        %974 = vdwg.mxu0
        %v975 = vmul.f32 %v972, 0.35355338
        %v976 = vsel %vm898, %v975, -inf
        %977 = vmax.xlane.f32.xlu0 %v976
        %v978 = vpop.xlane.xlu0 %977
        %v979 = vsub.f32 %v975, %v978
        %v980 = vmul.f32 %v979, 1.442695
        %v981 = vpow.pop %v980
        %v982 = vsel %vm898, %v981, 0.0
        %983 = vadd.xlane.f32.xlu0 %v982
        %v984 = vpop.xlane.xlu0 %983
        %v985 = vrcp.pop %v984
        %v986 = vmul.f32 %v981, %v985
        %s987 = smul.u32 %s37, 16
        %s988 = scalar_lea.vmem %s12, %s987
        %v989 = vld [vmem:[%s988] sm:$0xff]
        %v990 = vld [vmem:[%s988 + $0x8] sm:$0xff]
        %s991 = scalar_lea.vmem %s13, %s987
        %v992 = vld [vmem:[%s991] sm:$0xff]
        %v993 = vld [vmem:[%s991 + $0x8] sm:$0xff]
        %s994 = scalar_lea.vmem %s14, %s987
        %v995 = vld [vmem:[%s994] sm:$0xff]
        %v996 = vld [vmem:[%s994 + $0x8] sm:$0xff]
        %s997 = scalar_lea.vmem %s15, %s987
        %v998 = vld [vmem:[%s997] sm:$0xff]
        %v999 = vld [vmem:[%s997 + $0x8] sm:$0xff]
        %s1000 = scalar_lea.vmem %s16, %s987
        %v1001 = vld [vmem:[%s1000] sm:$0xff]
        %v1002 = vld [vmem:[%s1000 + $0x8] sm:$0xff]
        %s1003 = scalar_lea.vmem %s17, %s37
        %v1004 = vld [vmem:[%s1003] sm:$0x1]
        %1006 = vset.pattern.permute.xlu0 0
        %1007 = vperm.xlu0 %1006, %v989
        %v1008 = vpop.permute.xlu0 %1007
        %1011 = vset.pattern.permute.xlu0 0
        %1012 = vperm.xlu0 %1011, %v990
        %v1013 = vpop.permute.xlu0 %1012
        %v1015 = vlaneseq
        %v1016 = vshrl.u32 %v1015, 7
        %v1017 = vsub.s32 0, %v1016
        %v1018 = vrot.slane %v986, %v1017
        %v1019 = vmul.f32 %v1008, %v1018
        %v1020 = vmul.f32 %v1013, %v1018
        %1021 = vset.pattern.permute.xlu0 1
        %1022 = vperm.xlu0 %1021, %v989
        %v1023 = vpop.permute.xlu0 %1022
        %1025 = vset.pattern.permute.xlu0 1
        %1026 = vperm.xlu0 %1025, %v990
        %v1027 = vpop.permute.xlu0 %1026
        %v1029 = vlaneseq
        %v1030 = vshrl.u32 %v1029, 7
        %v1031 = vsub.s32 0, %v1030
        %v1032 = vrot.slane %v637, %v1031
        %v1033 = vmul.f32 %v1023, %v1032
        %v1034 = vmul.f32 %v1027, %v1032
        %v1035 = vadd.f32 %v1019, %v1033
        %v1036 = vadd.f32 %v1020, %v1034
        %1038 = vset.pattern.permute.xlu0 0
        %1039 = vperm.xlu0 %1038, %v992
        %v1040 = vpop.permute.xlu0 %1039
        %1043 = vset.pattern.permute.xlu0 0
        %1044 = vperm.xlu0 %1043, %v993
        %v1045 = vpop.permute.xlu0 %1044
        %v1047 = vadd.f32 %v1035, %v1040
        %v1048 = vadd.f32 %v1036, %v1045
        %v1049 = vmax.f32 %v1047, 0.0
        %v1050 = vmax.f32 %v1048, 0.0
        %1052 = vset.pattern.permute.xlu0 0
        %1053 = vperm.xlu0 %1052, %v998
        %v1054 = vpop.permute.xlu0 %1053
        %1057 = vset.pattern.permute.xlu0 0
        %1058 = vperm.xlu0 %1057, %v999
        %v1059 = vpop.permute.xlu0 %1058
        %vm1061 = vcmask 130048
        %v1063 = vsel %vm1061, %v995, 0
        %v1066 = vsel %vm1061, %v996, 0
        %1068 = vmatprep.subr.mxu0 0.0
        %1069 = vmatpush1.msra.mxu0 %v1049
        %1070 = vmatprep.subr.mxu0 0.0
        %1071 = vmatpush1.msra.mxu0 %v1050
        %1072 = vmatprep.subr.mxu0 0.0
        %1073 = vmatpush1.msra.mxu0 0.0
        %1074 = vmatprep.subr.mxu0 0.0
        %1075 = vmatpush1.msra.mxu0 0.0
        %1076 = vmatprep.subr.mxu0 0.0
        %1077 = vmatpush1.msra.mxu0 0.0
        %1078 = vmatprep.subr.mxu0 0.0
        %1079 = vmatpush1.msra.mxu0 0.0
        %1080 = vmatprep.subr.mxu0 0.0
        %1081 = vmatpush1.msra.mxu0 0.0
        %1082 = vmatprep.subr.mxu0 0.0
        %1083 = vmatpush1.msra.mxu0 0.0
        %1084 = vmatprep.subr.mxu0 0.0
        %1085 = vmatpush1.msra.mxu0 0.0
        %1086 = vmatprep.subr.mxu0 0.0
        %1087 = vmatpush1.msra.mxu0 0.0
        %1088 = vmatprep.subr.mxu0 0.0
        %1089 = vmatpush1.msra.mxu0 0.0
        %1090 = vmatprep.subr.mxu0 0.0
        %1091 = vmatpush1.msra.mxu0 0.0
        %1092 = vmatprep.subr.mxu0 0.0
        %1093 = vmatpush1.msra.mxu0 0.0
        %1094 = vmatprep.subr.mxu0 0.0
        %1095 = vmatpush1.msra.mxu0 0.0
        %1096 = vmatprep.subr.mxu0 0.0
        %1097 = vmatpush1.msra.mxu0 0.0
        %1098 = vmatprep.subr.mxu0 0.0
        %1099 = vmatpush1.msra.mxu0 0.0
        %1100 = vmatprep.subr.mxu0 0.0
        %1101 = vmatpush1.msra.mxu0 0.0
        %1102 = vmatprep.subr.mxu0 0.0
        %1103 = vmatpush1.msra.mxu0 0.0
        %1104 = vmatprep.subr.mxu0 0.0
        %1105 = vmatpush1.msra.mxu0 0.0
        %1106 = vmatprep.subr.mxu0 0.0
        %1107 = vmatpush1.msra.mxu0 0.0
        %1108 = vmatprep.subr.mxu0 0.0
        %1109 = vmatpush1.msra.mxu0 0.0
        %1110 = vmatprep.subr.mxu0 0.0
        %1111 = vmatpush1.msra.mxu0 0.0
        %1112 = vmatprep.subr.mxu0 0.0
        %1113 = vmatpush1.msra.mxu0 0.0
        %1114 = vmatprep.subr.mxu0 0.0
        %1115 = vmatpush1.msra.mxu0 0.0
        %1116 = vmatprep.subr.mxu0 0.0
        %1117 = vmatpush1.msra.mxu0 0.0
        %1118 = vmatprep.subr.mxu0 0.0
        %1119 = vmatpush1.msra.mxu0 0.0
        %1120 = vmatprep.subr.mxu0 0.0
        %1121 = vmatpush1.msra.mxu0 0.0
        %1122 = vmatprep.subr.mxu0 0.0
        %1123 = vmatpush1.msra.mxu0 0.0
        %1124 = vmatprep.subr.mxu0 0.0
        %1125 = vmatpush1.msra.mxu0 0.0
        %1126 = vmatprep.subr.mxu0 0.0
        %1127 = vmatpush1.msra.mxu0 0.0
        %1128 = vmatprep.subr.mxu0 0.0
        %1129 = vmatpush1.msra.mxu0 0.0
        %1130 = vmatprep.subr.mxu0 0.0
        %1131 = vmatpush1.msra.mxu0 0.0
        %1132 = vmatprep.mubr.f32.mxu0 0.0
        %1133 = vmatmul.mubr.f32.gmra.mrb[0].mxu0 %v1063
        %v1134 = vpop.f32.mrb[0].mxu0
        %v1135 = vadd.f32 %v1054, %v1134
        %v1136 = vpop.f32.mrb[0].mxu0
        %1137 = vmatprep.mubr.f32.mxu0 0.0
        %1138 = vmatmul.mubr.f32.gmra.mrb[0].mxu0 %v1066
        %v1139 = vpop.f32.mrb[0].mxu0
        %v1140 = vadd.f32 %v1059, %v1139
        %v1141 = vpop.f32.mrb[0].mxu0
        %1142 = vdwg.mxu0
        %v1143 = vmax.f32 %v1135, 0.0
        %v1144 = vmax.f32 %v1140, 0.0
        %1146 = vset.pattern.permute.xlu0 0
        %1147 = vperm.xlu0 %1146, %v1001
        %v1148 = vpop.permute.xlu0 %1147
        %1151 = vset.pattern.permute.xlu0 0
        %1152 = vperm.xlu0 %1151, %v1002
        %v1153 = vpop.permute.xlu0 %1152
        %v1155 = vmul.f32 %v1143, %v1148
        %v1156 = vmul.f32 %v1144, %v1153
        %v1157 = vsel %vm898, %v1155, 0.0
        %v1158 = vsel %vm898, %v1156, 0.0
        %v1159 = vadd.f32 %v1157, %v1158
        %v1160 = vrot.slane %v1159, 4
        %v1161 = vadd.f32 %v1159, %v1160
        %v1162 = vrot.slane %v1161, 2
        %v1163 = vadd.f32 %v1161, %v1162
        %v1164 = vrot.slane %v1163, 1
        %v1165 = vadd.f32 %v1163, %v1164
        %1167 = vset.pattern.permute.xlu0 0
        %1168 = vperm.xlu0 %1167, %v1004
        %v1169 = vpop.permute.xlu0 %1168
        %v1171 = vlaneseq
        %v1172 = vshrl.u32 %v1171, 7
        %v1173 = vsub.s32 0, %v1172
        %v1174 = vrot.slane %v1169, %v1173
        %v1175 = vadd.f32 %v1165, %v1174
        %vm1176 = vcmask 57344
        %1177 = vst.msk [vmem:[#allocation2] sm:$0x1] %vm1176, %v1175
        %v1178 = vlaneseq
        %v1179 = vshrl.u32 %v1178, 7
        %v1180 = vsub.s32 1, %v1179
        %v1181 = vrot.slane %v986, %v1180
        %v1182 = vmul.f32 %v1008, %v1181
        %v1183 = vmul.f32 %v1013, %v1181
        %v1184 = vlaneseq
        %v1185 = vshrl.u32 %v1184, 7
        %v1186 = vsub.s32 1, %v1185
        %v1187 = vrot.slane %v637, %v1186
        %v1188 = vmul.f32 %v1023, %v1187
        %v1189 = vmul.f32 %v1027, %v1187
        %v1190 = vadd.f32 %v1182, %v1188
        %v1191 = vadd.f32 %v1183, %v1189
        %v1192 = vadd.f32 %v1190, %v1040
        %v1193 = vadd.f32 %v1191, %v1045
        %v1194 = vmax.f32 %v1192, 0.0
        %v1195 = vmax.f32 %v1193, 0.0
        %1196 = vmatprep.subr.mxu0 0.0
        %1197 = vmatpush1.msra.mxu0 %v1194
        %1198 = vmatprep.subr.mxu0 0.0
        %1199 = vmatpush1.msra.mxu0 %v1195
        %1200 = vmatprep.subr.mxu0 0.0
        %1201 = vmatpush1.msra.mxu0 0.0
        %1202 = vmatprep.subr.mxu0 0.0
        %1203 = vmatpush1.msra.mxu0 0.0
        %1204 = vmatprep.subr.mxu0 0.0
        %1205 = vmatpush1.msra.mxu0 0.0
        %1206 = vmatprep.subr.mxu0 0.0
        %1207 = vmatpush1.msra.mxu0 0.0
        %1208 = vmatprep.subr.mxu0 0.0
        %1209 = vmatpush1.msra.mxu0 0.0
        %1210 = vmatprep.subr.mxu0 0.0
        %1211 = vmatpush1.msra.mxu0 0.0
        %1212 = vmatprep.subr.mxu0 0.0
        %1213 = vmatpush1.msra.mxu0 0.0
        %1214 = vmatprep.subr.mxu0 0.0
        %1215 = vmatpush1.msra.mxu0 0.0
        %1216 = vmatprep.subr.mxu0 0.0
        %1217 = vmatpush1.msra.mxu0 0.0
        %1218 = vmatprep.subr.mxu0 0.0
        %1219 = vmatpush1.msra.mxu0 0.0
        %1220 = vmatprep.subr.mxu0 0.0
        %1221 = vmatpush1.msra.mxu0 0.0
        %1222 = vmatprep.subr.mxu0 0.0
        %1223 = vmatpush1.msra.mxu0 0.0
        %1224 = vmatprep.subr.mxu0 0.0
        %1225 = vmatpush1.msra.mxu0 0.0
        %1226 = vmatprep.subr.mxu0 0.0
        %1227 = vmatpush1.msra.mxu0 0.0
        %1228 = vmatprep.subr.mxu0 0.0
        %1229 = vmatpush1.msra.mxu0 0.0
        %1230 = vmatprep.subr.mxu0 0.0
        %1231 = vmatpush1.msra.mxu0 0.0
        %1232 = vmatprep.subr.mxu0 0.0
        %1233 = vmatpush1.msra.mxu0 0.0
        %1234 = vmatprep.subr.mxu0 0.0
        %1235 = vmatpush1.msra.mxu0 0.0
        %1236 = vmatprep.subr.mxu0 0.0
        %1237 = vmatpush1.msra.mxu0 0.0
        %1238 = vmatprep.subr.mxu0 0.0
        %1239 = vmatpush1.msra.mxu0 0.0
        %1240 = vmatprep.subr.mxu0 0.0
        %1241 = vmatpush1.msra.mxu0 0.0
        %1242 = vmatprep.subr.mxu0 0.0
        %1243 = vmatpush1.msra.mxu0 0.0
        %1244 = vmatprep.subr.mxu0 0.0
        %1245 = vmatpush1.msra.mxu0 0.0
        %1246 = vmatprep.subr.mxu0 0.0
        %1247 = vmatpush1.msra.mxu0 0.0
        %1248 = vmatprep.subr.mxu0 0.0
        %1249 = vmatpush1.msra.mxu0 0.0
        %1250 = vmatprep.subr.mxu0 0.0
        %1251 = vmatpush1.msra.mxu0 0.0
        %1252 = vmatprep.subr.mxu0 0.0
        %1253 = vmatpush1.msra.mxu0 0.0
        %1254 = vmatprep.subr.mxu0 0.0
        %1255 = vmatpush1.msra.mxu0 0.0
        %1256 = vmatprep.subr.mxu0 0.0
        %1257 = vmatpush1.msra.mxu0 0.0
        %1258 = vmatprep.subr.mxu0 0.0
        %1259 = vmatpush1.msra.mxu0 0.0
        %1260 = vmatprep.mubr.f32.mxu0 0.0
        %1261 = vmatmul.mubr.f32.gmra.mrb[0].mxu0 %v1063
        %v1262 = vpop.f32.mrb[0].mxu0
        %v1263 = vadd.f32 %v1054, %v1262
        %v1264 = vpop.f32.mrb[0].mxu0
        %1265 = vmatprep.mubr.f32.mxu0 0.0
        %1266 = vmatmul.mubr.f32.gmra.mrb[0].mxu0 %v1066
        %v1267 = vpop.f32.mrb[0].mxu0
        %v1268 = vadd.f32 %v1059, %v1267
        %v1269 = vpop.f32.mrb[0].mxu0
        %1270 = vdwg.mxu0
        %v1271 = vmax.f32 %v1263, 0.0
        %v1272 = vmax.f32 %v1268, 0.0
        %v1273 = vmul.f32 %v1271, %v1148
        %v1274 = vmul.f32 %v1272, %v1153
        %v1275 = vsel %vm898, %v1273, 0.0
        %v1276 = vsel %vm898, %v1274, 0.0
        %v1277 = vadd.f32 %v1275, %v1276
        %v1278 = vrot.slane %v1277, 4
        %v1279 = vadd.f32 %v1277, %v1278
        %v1280 = vrot.slane %v1279, 2
        %v1281 = vadd.f32 %v1279, %v1280
        %v1282 = vrot.slane %v1281, 1
        %v1283 = vadd.f32 %v1281, %v1282
        %v1284 = vadd.f32 %v1283, %v1174
        %1285 = vst.msk [vmem:[#allocation2 + $0x1] sm:$0x1] %vm1176, %v1284
        %v1286 = vlaneseq
        %v1287 = vshrl.u32 %v1286, 7
        %v1288 = vsub.s32 2, %v1287
        %v1289 = vrot.slane %v986, %v1288
        %v1290 = vmul.f32 %v1008, %v1289
        %v1291 = vmul.f32 %v1013, %v1289
        %v1292 = vlaneseq
        %v1293 = vshrl.u32 %v1292, 7
        %v1294 = vsub.s32 2, %v1293
        %v1295 = vrot.slane %v637, %v1294
        %v1296 = vmul.f32 %v1023, %v1295
        %v1297 = vmul.f32 %v1027, %v1295
        %v1298 = vadd.f32 %v1290, %v1296
        %v1299 = vadd.f32 %v1291, %v1297
        %v1300 = vadd.f32 %v1298, %v1040
        %v1301 = vadd.f32 %v1299, %v1045
        %v1302 = vmax.f32 %v1300, 0.0
        %v1303 = vmax.f32 %v1301, 0.0
        %1304 = vmatprep.subr.mxu0 0.0
        %1305 = vmatpush1.msra.mxu0 %v1302
        %1306 = vmatprep.subr.mxu0 0.0
        %1307 = vmatpush1.msra.mxu0 %v1303
        %1308 = vmatprep.subr.mxu0 0.0
        %1309 = vmatpush1.msra.mxu0 0.0
        %1310 = vmatprep.subr.mxu0 0.0
        %1311 = vmatpush1.msra.mxu0 0.0
        %1312 = vmatprep.subr.mxu0 0.0
        %1313 = vmatpush1.msra.mxu0 0.0
        %1314 = vmatprep.subr.mxu0 0.0
        %1315 = vmatpush1.msra.mxu0 0.0
        %1316 = vmatprep.subr.mxu0 0.0
        %1317 = vmatpush1.msra.mxu0 0.0
        %1318 = vmatprep.subr.mxu0 0.0
        %1319 = vmatpush1.msra.mxu0 0.0
        %1320 = vmatprep.subr.mxu0 0.0
        %1321 = vmatpush1.msra.mxu0 0.0
        %1322 = vmatprep.subr.mxu0 0.0
        %1323 = vmatpush1.msra.mxu0 0.0
        %1324 = vmatprep.subr.mxu0 0.0
        %1325 = vmatpush1.msra.mxu0 0.0
        %1326 = vmatprep.subr.mxu0 0.0
        %1327 = vmatpush1.msra.mxu0 0.0
        %1328 = vmatprep.subr.mxu0 0.0
        %1329 = vmatpush1.msra.mxu0 0.0
        %1330 = vmatprep.subr.mxu0 0.0
        %1331 = vmatpush1.msra.mxu0 0.0
        %1332 = vmatprep.subr.mxu0 0.0
        %1333 = vmatpush1.msra.mxu0 0.0
        %1334 = vmatprep.subr.mxu0 0.0
        %1335 = vmatpush1.msra.mxu0 0.0
        %1336 = vmatprep.subr.mxu0 0.0
        %1337 = vmatpush1.msra.mxu0 0.0
        %1338 = vmatprep.subr.mxu0 0.0
        %1339 = vmatpush1.msra.mxu0 0.0
        %1340 = vmatprep.subr.mxu0 0.0
        %1341 = vmatpush1.msra.mxu0 0.0
        %1342 = vmatprep.subr.mxu0 0.0
        %1343 = vmatpush1.msra.mxu0 0.0
        %1344 = vmatprep.subr.mxu0 0.0
        %1345 = vmatpush1.msra.mxu0 0.0
        %1346 = vmatprep.subr.mxu0 0.0
        %1347 = vmatpush1.msra.mxu0 0.0
        %1348 = vmatprep.subr.mxu0 0.0
        %1349 = vmatpush1.msra.mxu0 0.0
        %1350 = vmatprep.subr.mxu0 0.0
        %1351 = vmatpush1.msra.mxu0 0.0
        %1352 = vmatprep.subr.mxu0 0.0
        %1353 = vmatpush1.msra.mxu0 0.0
        %1354 = vmatprep.subr.mxu0 0.0
        %1355 = vmatpush1.msra.mxu0 0.0
        %1356 = vmatprep.subr.mxu0 0.0
        %1357 = vmatpush1.msra.mxu0 0.0
        %1358 = vmatprep.subr.mxu0 0.0
        %1359 = vmatpush1.msra.mxu0 0.0
        %1360 = vmatprep.subr.mxu0 0.0
        %1361 = vmatpush1.msra.mxu0 0.0
        %1362 = vmatprep.subr.mxu0 0.0
        %1363 = vmatpush1.msra.mxu0 0.0
        %1364 = vmatprep.subr.mxu0 0.0
        %1365 = vmatpush1.msra.mxu0 0.0
        %1366 = vmatprep.subr.mxu0 0.0
        %1367 = vmatpush1.msra.mxu0 0.0
        %1368 = vmatprep.mubr.f32.mxu0 0.0
        %1369 = vmatmul.mubr.f32.gmra.mrb[0].mxu0 %v1063
        %v1370 = vpop.f32.mrb[0].mxu0
        %v1371 = vadd.f32 %v1054, %v1370
        %v1372 = vpop.f32.mrb[0].mxu0
        %1373 = vmatprep.mubr.f32.mxu0 0.0
        %1374 = vmatmul.mubr.f32.gmra.mrb[0].mxu0 %v1066
        %v1375 = vpop.f32.mrb[0].mxu0
        %v1376 = vadd.f32 %v1059, %v1375
        %v1377 = vpop.f32.mrb[0].mxu0
        %1378 = vdwg.mxu0
        %v1379 = vmax.f32 %v1371, 0.0
        %v1380 = vmax.f32 %v1376, 0.0
        %v1381 = vmul.f32 %v1379, %v1148
        %v1382 = vmul.f32 %v1380, %v1153
        %v1383 = vsel %vm898, %v1381, 0.0
        %v1384 = vsel %vm898, %v1382, 0.0
        %v1385 = vadd.f32 %v1383, %v1384
        %v1386 = vrot.slane %v1385, 4
        %v1387 = vadd.f32 %v1385, %v1386
        %v1388 = vrot.slane %v1387, 2
        %v1389 = vadd.f32 %v1387, %v1388
        %v1390 = vrot.slane %v1389, 1
        %v1391 = vadd.f32 %v1389, %v1390
        %v1392 = vadd.f32 %v1391, %v1174
        %1393 = vst.msk [vmem:[#allocation2 + $0x2] sm:$0x1] %vm1176, %v1392
        %v1394 = vlaneseq
        %v1395 = vshrl.u32 %v1394, 7
        %v1396 = vsub.s32 3, %v1395
        %v1397 = vrot.slane %v986, %v1396
        %v1398 = vmul.f32 %v1008, %v1397
        %v1399 = vmul.f32 %v1013, %v1397
        %v1400 = vlaneseq
        %v1401 = vshrl.u32 %v1400, 7
        %v1402 = vsub.s32 3, %v1401
        %v1403 = vrot.slane %v637, %v1402
        %v1404 = vmul.f32 %v1023, %v1403
        %v1405 = vmul.f32 %v1027, %v1403
        %v1406 = vadd.f32 %v1398, %v1404
        %v1407 = vadd.f32 %v1399, %v1405
        %v1408 = vadd.f32 %v1406, %v1040
        %v1409 = vadd.f32 %v1407, %v1045
        %v1410 = vmax.f32 %v1408, 0.0
        %v1411 = vmax.f32 %v1409, 0.0
        %1412 = vmatprep.subr.mxu0 0.0
        %1413 = vmatpush1.msra.mxu0 %v1410
        %1414 = vmatprep.subr.mxu0 0.0
        %1415 = vmatpush1.msra.mxu0 %v1411
        %1416 = vmatprep.subr.mxu0 0.0
        %1417 = vmatpush1.msra.mxu0 0.0
        %1418 = vmatprep.subr.mxu0 0.0
        %1419 = vmatpush1.msra.mxu0 0.0
        %1420 = vmatprep.subr.mxu0 0.0
        %1421 = vmatpush1.msra.mxu0 0.0
        %1422 = vmatprep.subr.mxu0 0.0
        %1423 = vmatpush1.msra.mxu0 0.0
        %1424 = vmatprep.subr.mxu0 0.0
        %1425 = vmatpush1.msra.mxu0 0.0
        %1426 = vmatprep.subr.mxu0 0.0
        %1427 = vmatpush1.msra.mxu0 0.0
        %1428 = vmatprep.subr.mxu0 0.0
        %1429 = vmatpush1.msra.mxu0 0.0
        %1430 = vmatprep.subr.mxu0 0.0
        %1431 = vmatpush1.msra.mxu0 0.0
        %1432 = vmatprep.subr.mxu0 0.0
        %1433 = vmatpush1.msra.mxu0 0.0
        %1434 = vmatprep.subr.mxu0 0.0
        %1435 = vmatpush1.msra.mxu0 0.0
        %1436 = vmatprep.subr.mxu0 0.0
        %1437 = vmatpush1.msra.mxu0 0.0
        %1438 = vmatprep.subr.mxu0 0.0
        %1439 = vmatpush1.msra.mxu0 0.0
        %1440 = vmatprep.subr.mxu0 0.0
        %1441 = vmatpush1.msra.mxu0 0.0
        %1442 = vmatprep.subr.mxu0 0.0
        %1443 = vmatpush1.msra.mxu0 0.0
        %1444 = vmatprep.subr.mxu0 0.0
        %1445 = vmatpush1.msra.mxu0 0.0
        %1446 = vmatprep.subr.mxu0 0.0
        %1447 = vmatpush1.msra.mxu0 0.0
        %1448 = vmatprep.subr.mxu0 0.0
        %1449 = vmatpush1.msra.mxu0 0.0
        %1450 = vmatprep.subr.mxu0 0.0
        %1451 = vmatpush1.msra.mxu0 0.0
        %1452 = vmatprep.subr.mxu0 0.0
        %1453 = vmatpush1.msra.mxu0 0.0
        %1454 = vmatprep.subr.mxu0 0.0
        %1455 = vmatpush1.msra.mxu0 0.0
        %1456 = vmatprep.subr.mxu0 0.0
        %1457 = vmatpush1.msra.mxu0 0.0
        %1458 = vmatprep.subr.mxu0 0.0
        %1459 = vmatpush1.msra.mxu0 0.0
        %1460 = vmatprep.subr.mxu0 0.0
        %1461 = vmatpush1.msra.mxu0 0.0
        %1462 = vmatprep.subr.mxu0 0.0
        %1463 = vmatpush1.msra.mxu0 0.0
        %1464 = vmatprep.subr.mxu0 0.0
        %1465 = vmatpush1.msra.mxu0 0.0
        %1466 = vmatprep.subr.mxu0 0.0
        %1467 = vmatpush1.msra.mxu0 0.0
        %1468 = vmatprep.subr.mxu0 0.0
        %1469 = vmatpush1.msra.mxu0 0.0
        %1470 = vmatprep.subr.mxu0 0.0
        %1471 = vmatpush1.msra.mxu0 0.0
        %1472 = vmatprep.subr.mxu0 0.0
        %1473 = vmatpush1.msra.mxu0 0.0
        %1474 = vmatprep.subr.mxu0 0.0
        %1475 = vmatpush1.msra.mxu0 0.0
        %1476 = vmatprep.mubr.f32.mxu0 0.0
        %1477 = vmatmul.mubr.f32.gmra.mrb[0].mxu0 %v1063
        %v1478 = vpop.f32.mrb[0].mxu0
        %v1479 = vadd.f32 %v1054, %v1478
        %v1480 = vpop.f32.mrb[0].mxu0
        %1481 = vmatprep.mubr.f32.mxu0 0.0
        %1482 = vmatmul.mubr.f32.gmra.mrb[0].mxu0 %v1066
        %v1483 = vpop.f32.mrb[0].mxu0
        %v1484 = vadd.f32 %v1059, %v1483
        %v1485 = vpop.f32.mrb[0].mxu0
        %1486 = vdwg.mxu0
        %v1487 = vmax.f32 %v1479, 0.0
        %v1488 = vmax.f32 %v1484, 0.0
        %v1489 = vmul.f32 %v1487, %v1148
        %v1490 = vmul.f32 %v1488, %v1153
        %v1491 = vsel %vm898, %v1489, 0.0
        %v1492 = vsel %vm898, %v1490, 0.0
        %v1493 = vadd.f32 %v1491, %v1492
        %v1494 = vrot.slane %v1493, 4
        %v1495 = vadd.f32 %v1493, %v1494
        %v1496 = vrot.slane %v1495, 2
        %v1497 = vadd.f32 %v1495, %v1496
        %v1498 = vrot.slane %v1497, 1
        %v1499 = vadd.f32 %v1497, %v1498
        %v1500 = vadd.f32 %v1499, %v1174
        %1501 = vst.msk [vmem:[#allocation2 + $0x3] sm:$0x1] %vm1176, %v1500
        %v1502 = vlaneseq
        %v1503 = vshrl.u32 %v1502, 7
        %v1504 = vsub.s32 4, %v1503
        %v1505 = vrot.slane %v986, %v1504
        %v1506 = vmul.f32 %v1008, %v1505
        %v1507 = vmul.f32 %v1013, %v1505
        %v1508 = vlaneseq
        %v1509 = vshrl.u32 %v1508, 7
        %v1510 = vsub.s32 4, %v1509
        %v1511 = vrot.slane %v637, %v1510
        %v1512 = vmul.f32 %v1023, %v1511
        %v1513 = vmul.f32 %v1027, %v1511
        %v1514 = vadd.f32 %v1506, %v1512
        %v1515 = vadd.f32 %v1507, %v1513
        %v1516 = vadd.f32 %v1514, %v1040
        %v1517 = vadd.f32 %v1515, %v1045
        %v1518 = vmax.f32 %v1516, 0.0
        %v1519 = vmax.f32 %v1517, 0.0
        %1520 = vmatprep.subr.mxu0 0.0
        %1521 = vmatpush1.msra.mxu0 %v1518
        %1522 = vmatprep.subr.mxu0 0.0
        %1523 = vmatpush1.msra.mxu0 %v1519
        %1524 = vmatprep.subr.mxu0 0.0
        %1525 = vmatpush1.msra.mxu0 0.0
        %1526 = vmatprep.subr.mxu0 0.0
        %1527 = vmatpush1.msra.mxu0 0.0
        %1528 = vmatprep.subr.mxu0 0.0
        %1529 = vmatpush1.msra.mxu0 0.0
        %1530 = vmatprep.subr.mxu0 0.0
        %1531 = vmatpush1.msra.mxu0 0.0
        %1532 = vmatprep.subr.mxu0 0.0
        %1533 = vmatpush1.msra.mxu0 0.0
        %1534 = vmatprep.subr.mxu0 0.0
        %1535 = vmatpush1.msra.mxu0 0.0
        %1536 = vmatprep.subr.mxu0 0.0
        %1537 = vmatpush1.msra.mxu0 0.0
        %1538 = vmatprep.subr.mxu0 0.0
        %1539 = vmatpush1.msra.mxu0 0.0
        %1540 = vmatprep.subr.mxu0 0.0
        %1541 = vmatpush1.msra.mxu0 0.0
        %1542 = vmatprep.subr.mxu0 0.0
        %1543 = vmatpush1.msra.mxu0 0.0
        %1544 = vmatprep.subr.mxu0 0.0
        %1545 = vmatpush1.msra.mxu0 0.0
        %1546 = vmatprep.subr.mxu0 0.0
        %1547 = vmatpush1.msra.mxu0 0.0
        %1548 = vmatprep.subr.mxu0 0.0
        %1549 = vmatpush1.msra.mxu0 0.0
        %1550 = vmatprep.subr.mxu0 0.0
        %1551 = vmatpush1.msra.mxu0 0.0
        %1552 = vmatprep.subr.mxu0 0.0
        %1553 = vmatpush1.msra.mxu0 0.0
        %1554 = vmatprep.subr.mxu0 0.0
        %1555 = vmatpush1.msra.mxu0 0.0
        %1556 = vmatprep.subr.mxu0 0.0
        %1557 = vmatpush1.msra.mxu0 0.0
        %1558 = vmatprep.subr.mxu0 0.0
        %1559 = vmatpush1.msra.mxu0 0.0
        %1560 = vmatprep.subr.mxu0 0.0
        %1561 = vmatpush1.msra.mxu0 0.0
        %1562 = vmatprep.subr.mxu0 0.0
        %1563 = vmatpush1.msra.mxu0 0.0
        %1564 = vmatprep.subr.mxu0 0.0
        %1565 = vmatpush1.msra.mxu0 0.0
        %1566 = vmatprep.subr.mxu0 0.0
        %1567 = vmatpush1.msra.mxu0 0.0
        %1568 = vmatprep.subr.mxu0 0.0
        %1569 = vmatpush1.msra.mxu0 0.0
        %1570 = vmatprep.subr.mxu0 0.0
        %1571 = vmatpush1.msra.mxu0 0.0
        %1572 = vmatprep.subr.mxu0 0.0
        %1573 = vmatpush1.msra.mxu0 0.0
        %1574 = vmatprep.subr.mxu0 0.0
        %1575 = vmatpush1.msra.mxu0 0.0
        %1576 = vmatprep.subr.mxu0 0.0
        %1577 = vmatpush1.msra.mxu0 0.0
        %1578 = vmatprep.subr.mxu0 0.0
        %1579 = vmatpush1.msra.mxu0 0.0
        %1580 = vmatprep.subr.mxu0 0.0
        %1581 = vmatpush1.msra.mxu0 0.0
        %1582 = vmatprep.subr.mxu0 0.0
        %1583 = vmatpush1.msra.mxu0 0.0
        %1584 = vmatprep.mubr.f32.mxu0 0.0
        %1585 = vmatmul.mubr.f32.gmra.mrb[0].mxu0 %v1063
        %v1586 = vpop.f32.mrb[0].mxu0
        %v1587 = vadd.f32 %v1054, %v1586
        %v1588 = vpop.f32.mrb[0].mxu0
        %1589 = vmatprep.mubr.f32.mxu0 0.0
        %1590 = vmatmul.mubr.f32.gmra.mrb[0].mxu0 %v1066
        %v1591 = vpop.f32.mrb[0].mxu0
        %v1592 = vadd.f32 %v1059, %v1591
        %v1593 = vpop.f32.mrb[0].mxu0
        %1594 = vdwg.mxu0
        %v1595 = vmax.f32 %v1587, 0.0
        %v1596 = vmax.f32 %v1592, 0.0
        %v1597 = vmul.f32 %v1595, %v1148
        %v1598 = vmul.f32 %v1596, %v1153
        %v1599 = vsel %vm898, %v1597, 0.0
        %v1600 = vsel %vm898, %v1598, 0.0
        %v1601 = vadd.f32 %v1599, %v1600
        %v1602 = vrot.slane %v1601, 4
        %v1603 = vadd.f32 %v1601, %v1602
        %v1604 = vrot.slane %v1603, 2
        %v1605 = vadd.f32 %v1603, %v1604
        %v1606 = vrot.slane %v1605, 1
        %v1607 = vadd.f32 %v1605, %v1606
        %v1608 = vadd.f32 %v1607, %v1174
        %1609 = vst.msk [vmem:[#allocation2 + $0x4] sm:$0x1] %vm1176, %v1608
        %v1610 = vlaneseq
        %v1611 = vshrl.u32 %v1610, 7
        %v1612 = vsub.s32 5, %v1611
        %v1613 = vrot.slane %v986, %v1612
        %v1614 = vmul.f32 %v1008, %v1613
        %v1615 = vmul.f32 %v1013, %v1613
        %v1616 = vlaneseq
        %v1617 = vshrl.u32 %v1616, 7
        %v1618 = vsub.s32 5, %v1617
        %v1619 = vrot.slane %v637, %v1618
        %v1620 = vmul.f32 %v1023, %v1619
        %v1621 = vmul.f32 %v1027, %v1619
        %v1622 = vadd.f32 %v1614, %v1620
        %v1623 = vadd.f32 %v1615, %v1621
        %v1624 = vadd.f32 %v1622, %v1040
        %v1625 = vadd.f32 %v1623, %v1045
        %v1626 = vmax.f32 %v1624, 0.0
        %v1627 = vmax.f32 %v1625, 0.0
        %1628 = vmatprep.subr.mxu0 0.0
        %1629 = vmatpush1.msra.mxu0 %v1626
        %1630 = vmatprep.subr.mxu0 0.0
        %1631 = vmatpush1.msra.mxu0 %v1627
        %1632 = vmatprep.subr.mxu0 0.0
        %1633 = vmatpush1.msra.mxu0 0.0
        %1634 = vmatprep.subr.mxu0 0.0
        %1635 = vmatpush1.msra.mxu0 0.0
        %1636 = vmatprep.subr.mxu0 0.0
        %1637 = vmatpush1.msra.mxu0 0.0
        %1638 = vmatprep.subr.mxu0 0.0
        %1639 = vmatpush1.msra.mxu0 0.0
        %1640 = vmatprep.subr.mxu0 0.0
        %1641 = vmatpush1.msra.mxu0 0.0
        %1642 = vmatprep.subr.mxu0 0.0
        %1643 = vmatpush1.msra.mxu0 0.0
        %1644 = vmatprep.subr.mxu0 0.0
        %1645 = vmatpush1.msra.mxu0 0.0
        %1646 = vmatprep.subr.mxu0 0.0
        %1647 = vmatpush1.msra.mxu0 0.0
        %1648 = vmatprep.subr.mxu0 0.0
        %1649 = vmatpush1.msra.mxu0 0.0
        %1650 = vmatprep.subr.mxu0 0.0
        %1651 = vmatpush1.msra.mxu0 0.0
        %1652 = vmatprep.subr.mxu0 0.0
        %1653 = vmatpush1.msra.mxu0 0.0
        %1654 = vmatprep.subr.mxu0 0.0
        %1655 = vmatpush1.msra.mxu0 0.0
        %1656 = vmatprep.subr.mxu0 0.0
        %1657 = vmatpush1.msra.mxu0 0.0
        %1658 = vmatprep.subr.mxu0 0.0
        %1659 = vmatpush1.msra.mxu0 0.0
        %1660 = vmatprep.subr.mxu0 0.0
        %1661 = vmatpush1.msra.mxu0 0.0
        %1662 = vmatprep.subr.mxu0 0.0
        %1663 = vmatpush1.msra.mxu0 0.0
        %1664 = vmatprep.subr.mxu0 0.0
        %1665 = vmatpush1.msra.mxu0 0.0
        %1666 = vmatprep.subr.mxu0 0.0
        %1667 = vmatpush1.msra.mxu0 0.0
        %1668 = vmatprep.subr.mxu0 0.0
        %1669 = vmatpush1.msra.mxu0 0.0
        %1670 = vmatprep.subr.mxu0 0.0
        %1671 = vmatpush1.msra.mxu0 0.0
        %1672 = vmatprep.subr.mxu0 0.0
        %1673 = vmatpush1.msra.mxu0 0.0
        %1674 = vmatprep.subr.mxu0 0.0
        %1675 = vmatpush1.msra.mxu0 0.0
        %1676 = vmatprep.subr.mxu0 0.0
        %1677 = vmatpush1.msra.mxu0 0.0
        %1678 = vmatprep.subr.mxu0 0.0
        %1679 = vmatpush1.msra.mxu0 0.0
        %1680 = vmatprep.subr.mxu0 0.0
        %1681 = vmatpush1.msra.mxu0 0.0
        %1682 = vmatprep.subr.mxu0 0.0
        %1683 = vmatpush1.msra.mxu0 0.0
        %1684 = vmatprep.subr.mxu0 0.0
        %1685 = vmatpush1.msra.mxu0 0.0
        %1686 = vmatprep.subr.mxu0 0.0
        %1687 = vmatpush1.msra.mxu0 0.0
        %1688 = vmatprep.subr.mxu0 0.0
        %1689 = vmatpush1.msra.mxu0 0.0
        %1690 = vmatprep.subr.mxu0 0.0
        %1691 = vmatpush1.msra.mxu0 0.0
        %1692 = vmatprep.mubr.f32.mxu0 0.0
        %1693 = vmatmul.mubr.f32.gmra.mrb[0].mxu0 %v1063
        %v1694 = vpop.f32.mrb[0].mxu0
        %v1695 = vadd.f32 %v1054, %v1694
        %v1696 = vpop.f32.mrb[0].mxu0
        %1697 = vmatprep.mubr.f32.mxu0 0.0
        %1698 = vmatmul.mubr.f32.gmra.mrb[0].mxu0 %v1066
        %v1699 = vpop.f32.mrb[0].mxu0
        %v1700 = vadd.f32 %v1059, %v1699
        %v1701 = vpop.f32.mrb[0].mxu0
        %1702 = vdwg.mxu0
        %v1703 = vmax.f32 %v1695, 0.0
        %v1704 = vmax.f32 %v1700, 0.0
        %v1705 = vmul.f32 %v1703, %v1148
        %v1706 = vmul.f32 %v1704, %v1153
        %v1707 = vsel %vm898, %v1705, 0.0
        %v1708 = vsel %vm898, %v1706, 0.0
        %v1709 = vadd.f32 %v1707, %v1708
        %v1710 = vrot.slane %v1709, 4
        %v1711 = vadd.f32 %v1709, %v1710
        %v1712 = vrot.slane %v1711, 2
        %v1713 = vadd.f32 %v1711, %v1712
        %v1714 = vrot.slane %v1713, 1
        %v1715 = vadd.f32 %v1713, %v1714
        %v1716 = vadd.f32 %v1715, %v1174
        %1717 = vst.msk [vmem:[#allocation2 + $0x5] sm:$0x1] %vm1176, %v1716
        %v1718 = vlaneseq
        %v1719 = vshrl.u32 %v1718, 7
        %v1720 = vsub.s32 6, %v1719
        %v1721 = vrot.slane %v986, %v1720
        %v1722 = vmul.f32 %v1008, %v1721
        %v1723 = vmul.f32 %v1013, %v1721
        %v1724 = vlaneseq
        %v1725 = vshrl.u32 %v1724, 7
        %v1726 = vsub.s32 6, %v1725
        %v1727 = vrot.slane %v637, %v1726
        %v1728 = vmul.f32 %v1023, %v1727
        %v1729 = vmul.f32 %v1027, %v1727
        %v1730 = vadd.f32 %v1722, %v1728
        %v1731 = vadd.f32 %v1723, %v1729
        %v1732 = vadd.f32 %v1730, %v1040
        %v1733 = vadd.f32 %v1731, %v1045
        %v1734 = vmax.f32 %v1732, 0.0
        %v1735 = vmax.f32 %v1733, 0.0
        %1736 = vmatprep.subr.mxu0 0.0
        %1737 = vmatpush1.msra.mxu0 %v1734
        %1738 = vmatprep.subr.mxu0 0.0
        %1739 = vmatpush1.msra.mxu0 %v1735
        %1740 = vmatprep.subr.mxu0 0.0
        %1741 = vmatpush1.msra.mxu0 0.0
        %1742 = vmatprep.subr.mxu0 0.0
        %1743 = vmatpush1.msra.mxu0 0.0
        %1744 = vmatprep.subr.mxu0 0.0
        %1745 = vmatpush1.msra.mxu0 0.0
        %1746 = vmatprep.subr.mxu0 0.0
        %1747 = vmatpush1.msra.mxu0 0.0
        %1748 = vmatprep.subr.mxu0 0.0
        %1749 = vmatpush1.msra.mxu0 0.0
        %1750 = vmatprep.subr.mxu0 0.0
        %1751 = vmatpush1.msra.mxu0 0.0
        %1752 = vmatprep.subr.mxu0 0.0
        %1753 = vmatpush1.msra.mxu0 0.0
        %1754 = vmatprep.subr.mxu0 0.0
        %1755 = vmatpush1.msra.mxu0 0.0
        %1756 = vmatprep.subr.mxu0 0.0
        %1757 = vmatpush1.msra.mxu0 0.0
        %1758 = vmatprep.subr.mxu0 0.0
        %1759 = vmatpush1.msra.mxu0 0.0
        %1760 = vmatprep.subr.mxu0 0.0
        %1761 = vmatpush1.msra.mxu0 0.0
        %1762 = vmatprep.subr.mxu0 0.0
        %1763 = vmatpush1.msra.mxu0 0.0
        %1764 = vmatprep.subr.mxu0 0.0
        %1765 = vmatpush1.msra.mxu0 0.0
        %1766 = vmatprep.subr.mxu0 0.0
        %1767 = vmatpush1.msra.mxu0 0.0
        %1768 = vmatprep.subr.mxu0 0.0
        %1769 = vmatpush1.msra.mxu0 0.0
        %1770 = vmatprep.subr.mxu0 0.0
        %1771 = vmatpush1.msra.mxu0 0.0
        %1772 = vmatprep.subr.mxu0 0.0
        %1773 = vmatpush1.msra.mxu0 0.0
        %1774 = vmatprep.subr.mxu0 0.0
        %1775 = vmatpush1.msra.mxu0 0.0
        %1776 = vmatprep.subr.mxu0 0.0
        %1777 = vmatpush1.msra.mxu0 0.0
        %1778 = vmatprep.subr.mxu0 0.0
        %1779 = vmatpush1.msra.mxu0 0.0
        %1780 = vmatprep.subr.mxu0 0.0
        %1781 = vmatpush1.msra.mxu0 0.0
        %1782 = vmatprep.subr.mxu0 0.0
        %1783 = vmatpush1.msra.mxu0 0.0
        %1784 = vmatprep.subr.mxu0 0.0
        %1785 = vmatpush1.msra.mxu0 0.0
        %1786 = vmatprep.subr.mxu0 0.0
        %1787 = vmatpush1.msra.mxu0 0.0
        %1788 = vmatprep.subr.mxu0 0.0
        %1789 = vmatpush1.msra.mxu0 0.0
        %1790 = vmatprep.subr.mxu0 0.0
        %1791 = vmatpush1.msra.mxu0 0.0
        %1792 = vmatprep.subr.mxu0 0.0
        %1793 = vmatpush1.msra.mxu0 0.0
        %1794 = vmatprep.subr.mxu0 0.0
        %1795 = vmatpush1.msra.mxu0 0.0
        %1796 = vmatprep.subr.mxu0 0.0
        %1797 = vmatpush1.msra.mxu0 0.0
        %1798 = vmatprep.subr.mxu0 0.0
        %1799 = vmatpush1.msra.mxu0 0.0
        %1800 = vmatprep.mubr.f32.mxu0 0.0
        %1801 = vmatmul.mubr.f32.gmra.mrb[0].mxu0 %v1063
        %v1802 = vpop.f32.mrb[0].mxu0
        %v1803 = vadd.f32 %v1054, %v1802
        %v1804 = vpop.f32.mrb[0].mxu0
        %1805 = vmatprep.mubr.f32.mxu0 0.0
        %1806 = vmatmul.mubr.f32.gmra.mrb[0].mxu0 %v1066
        %v1807 = vpop.f32.mrb[0].mxu0
        %v1808 = vadd.f32 %v1059, %v1807
        %v1809 = vpop.f32.mrb[0].mxu0
        %1810 = vdwg.mxu0
        %v1811 = vmax.f32 %v1803, 0.0
        %v1812 = vmax.f32 %v1808, 0.0
        %v1813 = vmul.f32 %v1811, %v1148
        %v1814 = vmul.f32 %v1812, %v1153
        %v1815 = vsel %vm898, %v1813, 0.0
        %v1816 = vsel %vm898, %v1814, 0.0
        %v1817 = vadd.f32 %v1815, %v1816
        %v1818 = vrot.slane %v1817, 4
        %v1819 = vadd.f32 %v1817, %v1818
        %v1820 = vrot.slane %v1819, 2
        %v1821 = vadd.f32 %v1819, %v1820
        %v1822 = vrot.slane %v1821, 1
        %v1823 = vadd.f32 %v1821, %v1822
        %v1824 = vadd.f32 %v1823, %v1174
        %1825 = vst.msk [vmem:[#allocation2 + $0x6] sm:$0x1] %vm1176, %v1824
        %v1826 = vlaneseq
        %v1827 = vshrl.u32 %v1826, 7
        %v1828 = vsub.s32 7, %v1827
        %v1829 = vrot.slane %v986, %v1828
        %v1830 = vmul.f32 %v1008, %v1829
        %v1831 = vmul.f32 %v1013, %v1829
        %v1832 = vlaneseq
        %v1833 = vshrl.u32 %v1832, 7
        %v1834 = vsub.s32 7, %v1833
        %v1835 = vrot.slane %v637, %v1834
        %v1836 = vmul.f32 %v1023, %v1835
        %v1837 = vmul.f32 %v1027, %v1835
        %v1838 = vadd.f32 %v1830, %v1836
        %v1839 = vadd.f32 %v1831, %v1837
        %v1840 = vadd.f32 %v1838, %v1040
        %v1841 = vadd.f32 %v1839, %v1045
        %v1842 = vmax.f32 %v1840, 0.0
        %v1843 = vmax.f32 %v1841, 0.0
        %1844 = vmatprep.subr.mxu0 0.0
        %1845 = vmatpush1.msra.mxu0 %v1842
        %1846 = vmatprep.subr.mxu0 0.0
        %1847 = vmatpush1.msra.mxu0 %v1843
        %1848 = vmatprep.subr.mxu0 0.0
        %1849 = vmatpush1.msra.mxu0 0.0
        %1850 = vmatprep.subr.mxu0 0.0
        %1851 = vmatpush1.msra.mxu0 0.0
        %1852 = vmatprep.subr.mxu0 0.0
        %1853 = vmatpush1.msra.mxu0 0.0
        %1854 = vmatprep.subr.mxu0 0.0
        %1855 = vmatpush1.msra.mxu0 0.0
        %1856 = vmatprep.subr.mxu0 0.0
        %1857 = vmatpush1.msra.mxu0 0.0
        %1858 = vmatprep.subr.mxu0 0.0
        %1859 = vmatpush1.msra.mxu0 0.0
        %1860 = vmatprep.subr.mxu0 0.0
        %1861 = vmatpush1.msra.mxu0 0.0
        %1862 = vmatprep.subr.mxu0 0.0
        %1863 = vmatpush1.msra.mxu0 0.0
        %1864 = vmatprep.subr.mxu0 0.0
        %1865 = vmatpush1.msra.mxu0 0.0
        %1866 = vmatprep.subr.mxu0 0.0
        %1867 = vmatpush1.msra.mxu0 0.0
        %1868 = vmatprep.subr.mxu0 0.0
        %1869 = vmatpush1.msra.mxu0 0.0
        %1870 = vmatprep.subr.mxu0 0.0
        %1871 = vmatpush1.msra.mxu0 0.0
        %1872 = vmatprep.subr.mxu0 0.0
        %1873 = vmatpush1.msra.mxu0 0.0
        %1874 = vmatprep.subr.mxu0 0.0
        %1875 = vmatpush1.msra.mxu0 0.0
        %1876 = vmatprep.subr.mxu0 0.0
        %1877 = vmatpush1.msra.mxu0 0.0
        %1878 = vmatprep.subr.mxu0 0.0
        %1879 = vmatpush1.msra.mxu0 0.0
        %1880 = vmatprep.subr.mxu0 0.0
        %1881 = vmatpush1.msra.mxu0 0.0
        %1882 = vmatprep.subr.mxu0 0.0
        %1883 = vmatpush1.msra.mxu0 0.0
        %1884 = vmatprep.subr.mxu0 0.0
        %1885 = vmatpush1.msra.mxu0 0.0
        %1886 = vmatprep.subr.mxu0 0.0
        %1887 = vmatpush1.msra.mxu0 0.0
        %1888 = vmatprep.subr.mxu0 0.0
        %1889 = vmatpush1.msra.mxu0 0.0
        %1890 = vmatprep.subr.mxu0 0.0
        %1891 = vmatpush1.msra.mxu0 0.0
        %1892 = vmatprep.subr.mxu0 0.0
        %1893 = vmatpush1.msra.mxu0 0.0
        %1894 = vmatprep.subr.mxu0 0.0
        %1895 = vmatpush1.msra.mxu0 0.0
        %1896 = vmatprep.subr.mxu0 0.0
        %1897 = vmatpush1.msra.mxu0 0.0
        %1898 = vmatprep.subr.mxu0 0.0
        %1899 = vmatpush1.msra.mxu0 0.0
        %1900 = vmatprep.subr.mxu0 0.0
        %1901 = vmatpush1.msra.mxu0 0.0
        %1902 = vmatprep.subr.mxu0 0.0
        %1903 = vmatpush1.msra.mxu0 0.0
        %1904 = vmatprep.subr.mxu0 0.0
        %1905 = vmatpush1.msra.mxu0 0.0
        %1906 = vmatprep.subr.mxu0 0.0
        %1907 = vmatpush1.msra.mxu0 0.0
        %1908 = vmatprep.mubr.f32.mxu0 0.0
        %1909 = vmatmul.mubr.f32.gmra.mrb[0].mxu0 %v1063
        %v1910 = vpop.f32.mrb[0].mxu0
        %v1911 = vadd.f32 %v1054, %v1910
        %v1912 = vpop.f32.mrb[0].mxu0
        %1913 = vmatprep.mubr.f32.mxu0 0.0
        %1914 = vmatmul.mubr.f32.gmra.mrb[0].mxu0 %v1066
        %v1915 = vpop.f32.mrb[0].mxu0
        %v1916 = vadd.f32 %v1059, %v1915
        %v1917 = vpop.f32.mrb[0].mxu0
        %1918 = vdwg.mxu0
        %v1919 = vmax.f32 %v1911, 0.0
        %v1920 = vmax.f32 %v1916, 0.0
        %v1921 = vmul.f32 %v1919, %v1148
        %v1922 = vmul.f32 %v1920, %v1153
        %v1923 = vsel %vm898, %v1921, 0.0
        %v1924 = vsel %vm898, %v1922, 0.0
        %v1925 = vadd.f32 %v1923, %v1924
        %v1926 = vrot.slane %v1925, 4
        %v1927 = vadd.f32 %v1925, %v1926
        %v1928 = vrot.slane %v1927, 2
        %v1929 = vadd.f32 %v1927, %v1928
        %v1930 = vrot.slane %v1929, 1
        %v1931 = vadd.f32 %v1929, %v1930
        %v1932 = vadd.f32 %v1931, %v1174
        %1933 = vst.msk [vmem:[#allocation2 + $0x7] sm:$0x1] %vm1176, %v1932
        %v1934 = vld [vmem:[#allocation2] sm:$0xff]
        %v1936 = vsel %vm898, %v1934, 0
        %1938 = vmatprep.subr.mxu0 0.0
        %1939 = vmatpush1.msra.mxu0 %v895
        %1940 = vmatprep.subr.mxu0 0.0
        %1941 = vmatpush1.msra.mxu0 0.0
        %1942 = vmatprep.subr.mxu0 0.0
        %1943 = vmatpush1.msra.mxu0 0.0
        %1944 = vmatprep.subr.mxu0 0.0
        %1945 = vmatpush1.msra.mxu0 0.0
        %1946 = vmatprep.subr.mxu0 0.0
        %1947 = vmatpush1.msra.mxu0 0.0
        %1948 = vmatprep.subr.mxu0 0.0
        %1949 = vmatpush1.msra.mxu0 0.0
        %1950 = vmatprep.subr.mxu0 0.0
        %1951 = vmatpush1.msra.mxu0 0.0
        %1952 = vmatprep.subr.mxu0 0.0
        %1953 = vmatpush1.msra.mxu0 0.0
        %1954 = vmatprep.subr.mxu0 0.0
        %1955 = vmatpush1.msra.mxu0 0.0
        %1956 = vmatprep.subr.mxu0 0.0
        %1957 = vmatpush1.msra.mxu0 0.0
        %1958 = vmatprep.subr.mxu0 0.0
        %1959 = vmatpush1.msra.mxu0 0.0
        %1960 = vmatprep.subr.mxu0 0.0
        %1961 = vmatpush1.msra.mxu0 0.0
        %1962 = vmatprep.subr.mxu0 0.0
        %1963 = vmatpush1.msra.mxu0 0.0
        %1964 = vmatprep.subr.mxu0 0.0
        %1965 = vmatpush1.msra.mxu0 0.0
        %1966 = vmatprep.subr.mxu0 0.0
        %1967 = vmatpush1.msra.mxu0 0.0
        %1968 = vmatprep.subr.mxu0 0.0
        %1969 = vmatpush1.msra.mxu0 0.0
        %1970 = vmatprep.subr.mxu0 0.0
        %1971 = vmatpush1.msra.mxu0 0.0
        %1972 = vmatprep.subr.mxu0 0.0
        %1973 = vmatpush1.msra.mxu0 0.0
        %1974 = vmatprep.subr.mxu0 0.0
        %1975 = vmatpush1.msra.mxu0 0.0
        %1976 = vmatprep.subr.mxu0 0.0
        %1977 = vmatpush1.msra.mxu0 0.0
        %1978 = vmatprep.subr.mxu0 0.0
        %1979 = vmatpush1.msra.mxu0 0.0
        %1980 = vmatprep.subr.mxu0 0.0
        %1981 = vmatpush1.msra.mxu0 0.0
        %1982 = vmatprep.subr.mxu0 0.0
        %1983 = vmatpush1.msra.mxu0 0.0
        %1984 = vmatprep.subr.mxu0 0.0
        %1985 = vmatpush1.msra.mxu0 0.0
        %1986 = vmatprep.subr.mxu0 0.0
        %1987 = vmatpush1.msra.mxu0 0.0
        %1988 = vmatprep.subr.mxu0 0.0
        %1989 = vmatpush1.msra.mxu0 0.0
        %1990 = vmatprep.subr.mxu0 0.0
        %1991 = vmatpush1.msra.mxu0 0.0
        %1992 = vmatprep.subr.mxu0 0.0
        %1993 = vmatpush1.msra.mxu0 0.0
        %1994 = vmatprep.subr.mxu0 0.0
        %1995 = vmatpush1.msra.mxu0 0.0
        %1996 = vmatprep.subr.mxu0 0.0
        %1997 = vmatpush1.msra.mxu0 0.0
        %1998 = vmatprep.subr.mxu0 0.0
        %1999 = vmatpush1.msra.mxu0 0.0
        %2000 = vmatprep.subr.mxu0 0.0
        %2001 = vmatpush1.msra.mxu0 0.0
        %2002 = vmatprep.mubr.f32.mxu0 0.0
        %2003 = vmatmul.mubr.f32.gmra.mrb[0].mxu0 %v1936
        %v2004 = vpop.f32.mrb[0].mxu0
        %v2005 = vadd.f32 0.0, %v2004
        %v2006 = vpop.f32.mrb[0].mxu0
        %2007 = vdwg.mxu0
        %s2008 = smul.u32 %s37, 8
        %s2009 = scalar_lea.vmem %s10, %s2008
        %v2010 = vld [vmem:[%s2009] sm:$0xff]
        %v2012 = vsel %vm898, %v2005, 0
        %2014 = vmatprep.subr.mxu0 0.0
        %2015 = vmatpush1.msra.mxu0 %v2010
        %2016 = vmatprep.subr.mxu0 0.0
        %2017 = vmatpush1.msra.mxu0 0.0
        %2018 = vmatprep.subr.mxu0 0.0
        %2019 = vmatpush1.msra.mxu0 0.0
        %2020 = vmatprep.subr.mxu0 0.0
        %2021 = vmatpush1.msra.mxu0 0.0
        %2022 = vmatprep.subr.mxu0 0.0
        %2023 = vmatpush1.msra.mxu0 0.0
        %2024 = vmatprep.subr.mxu0 0.0
        %2025 = vmatpush1.msra.mxu0 0.0
        %2026 = vmatprep.subr.mxu0 0.0
        %2027 = vmatpush1.msra.mxu0 0.0
        %2028 = vmatprep.subr.mxu0 0.0
        %2029 = vmatpush1.msra.mxu0 0.0
        %2030 = vmatprep.subr.mxu0 0.0
        %2031 = vmatpush1.msra.mxu0 0.0
        %2032 = vmatprep.subr.mxu0 0.0
        %2033 = vmatpush1.msra.mxu0 0.0
        %2034 = vmatprep.subr.mxu0 0.0
        %2035 = vmatpush1.msra.mxu0 0.0
        %2036 = vmatprep.subr.mxu0 0.0
        %2037 = vmatpush1.msra.mxu0 0.0
        %2038 = vmatprep.subr.mxu0 0.0
        %2039 = vmatpush1.msra.mxu0 0.0
        %2040 = vmatprep.subr.mxu0 0.0
        %2041 = vmatpush1.msra.mxu0 0.0
        %2042 = vmatprep.subr.mxu0 0.0
        %2043 = vmatpush1.msra.mxu0 0.0
        %2044 = vmatprep.subr.mxu0 0.0
        %2045 = vmatpush1.msra.mxu0 0.0
        %2046 = vmatprep.subr.mxu0 0.0
        %2047 = vmatpush1.msra.mxu0 0.0
        %2048 = vmatprep.subr.mxu0 0.0
        %2049 = vmatpush1.msra.mxu0 0.0
        %2050 = vmatprep.subr.mxu0 0.0
        %2051 = vmatpush1.msra.mxu0 0.0
        %2052 = vmatprep.subr.mxu0 0.0
        %2053 = vmatpush1.msra.mxu0 0.0
        %2054 = vmatprep.subr.mxu0 0.0
        %2055 = vmatpush1.msra.mxu0 0.0
        %2056 = vmatprep.subr.mxu0 0.0
        %2057 = vmatpush1.msra.mxu0 0.0
        %2058 = vmatprep.subr.mxu0 0.0
        %2059 = vmatpush1.msra.mxu0 0.0
        %2060 = vmatprep.subr.mxu0 0.0
        %2061 = vmatpush1.msra.mxu0 0.0
        %2062 = vmatprep.subr.mxu0 0.0
        %2063 = vmatpush1.msra.mxu0 0.0
        %2064 = vmatprep.subr.mxu0 0.0
        %2065 = vmatpush1.msra.mxu0 0.0
        %2066 = vmatprep.subr.mxu0 0.0
        %2067 = vmatpush1.msra.mxu0 0.0
        %2068 = vmatprep.subr.mxu0 0.0
        %2069 = vmatpush1.msra.mxu0 0.0
        %2070 = vmatprep.subr.mxu0 0.0
        %2071 = vmatpush1.msra.mxu0 0.0
        %2072 = vmatprep.subr.mxu0 0.0
        %2073 = vmatpush1.msra.mxu0 0.0
        %2074 = vmatprep.subr.mxu0 0.0
        %2075 = vmatpush1.msra.mxu0 0.0
        %2076 = vmatprep.subr.mxu0 0.0
        %2077 = vmatpush1.msra.mxu0 0.0
        %2078 = vmatprep.mubr.f32.mxu0 0.0
        %2079 = vmatmul.mubr.f32.gmra.mrb[0].mxu0 %v2012
        %v2080 = vpop.f32.mrb[0].mxu0
        %v2081 = vadd.f32 0.0, %v2080
        %v2082 = vpop.f32.mrb[0].mxu0
        %2083 = vdwg.mxu0
        %p2084 = scmp.eq.s32.totalorder %s37, 0
        // Predicated region
        $region93: #{tpu_custom_call.1} parent=91 // pred_check
          %p2085 = pneg %p2084
        $region94: #{tpu_custom_call.1} parent=91 // pred_check_branch
          %2087 = sbr.rel (%p2085) target = $region96
        $region95: #{tpu_custom_call.1} parent=91 // pred_region
          %v2088 = vld [vmem:[%s11] sm:$0x1]
          %v2090 = vlaneseq
          %v2091 = vshrl.u32 %v2090, 7
          %v2092 = vsub.s32 0, %v2091
          %v2093 = vrot.slane %v2088, %v2092
          %2095 = vst.msk [vmem:[%s617] sm:$0xff] %vm652, %v2093
        $region96: #{tpu_custom_call.1} parent=91 // pred_fallthru
          _
        %v2096 = vld [vmem:[%s617] sm:$0xff]
        %v2097 = vadd.f32 %v2096, %v2081
        %2098 = vst.msk [vmem:[%s617] sm:$0xff] %vm652, %v2097
        %s2099 = sand.u32 %s450, 1
        %s2100 = scalar_lea.sflag [#allocation4], %s2099
        %s2101 = sand.u32 %s450, 1
        %s2102 = smul.addr %s2101, 8
        %s2103 = scalar_lea.vmem [#allocation3], %s2102
        // Predicated region
        $region97: #{tpu_custom_call.1} parent=91 // pred_check
          %p2104 = pneg %p460
        $region98: #{tpu_custom_call.1} parent=91 // pred_check_branch
          %2106 = sbr.rel (%p2104) target = $region100
        $region99: #{tpu_custom_call.1} parent=91 // pred_region
          %s2108 = ssub.s32 128, 128
          %2109 = vsyncadd %s2100, %s2108
          %s2110 = smul.addr %s36, 128
          %s2111 = scalar_lea.hbm %s18, %s2110
          %s2113 = sshll.u32 %s2103, 4
          %s2114 = int_to_ptr.vmem [resolvable:$true] %s2113
          %2116 = dma.vmem_to_hbm [thread:$0]  %s2114, 128, %s2111, %s2100
        $region100: #{tpu_custom_call.1} parent=91 // pred_fallthru
          _
      $region92: #{tpu_custom_call.1} parent=5 // pred_fallthru
        _
      %p2117 = scmp.le.s32.totalorder 2, %s27
      // Predicated region
      $region101: #{tpu_custom_call.1} parent=5 // pred_check
        %p2118 = pneg %p2117
      $region102: #{tpu_custom_call.1} parent=5 // pred_check_branch
        %2120 = sbr.rel (%p2118) target = $region104
      $region103: #{tpu_custom_call.1} parent=5 // pred_region
        %s2121 = ssub.s32 %s27, 2
        // Predicated region
        $region105: #{tpu_custom_call.1} parent=103 // pred_check
          %p2122 = pneg %p466
        $region106: #{tpu_custom_call.1} parent=103 // pred_check_branch
          %2124 = sbr.rel (%p2122) target = $region108
        $region107: #{tpu_custom_call.1} parent=103 // pred_region
          %s2125 = sand.u32 %s451, 1
          %s2126 = scalar_lea.sflag [#allocation4], %s2125
          %s2127 = sand.u32 %s451, 1
          %s2128 = smul.addr %s2127, 8
          %s2129 = scalar_lea.vmem [#allocation3], %s2128
          %2130 = dma.done %s2126, 128
        $region108: #{tpu_custom_call.1} parent=103 // pred_fallthru
          _
      $region104: #{tpu_custom_call.1} parent=5 // pred_fallthru
        _
    $region6: #{tpu_custom_call.1} parent=1 // loop_footer
      %s31 = sadd.s32 1, %s27
    $region7: #{tpu_custom_call.1} parent=1 // loop_footer_branch
      %26 = sbr.rel target = $region3
    $region8: #{tpu_custom_call.1} parent=1 // loop_exit
      _
    %2131 = vsyncpa [#allocation4], 1
    %s2132 = scalar_lea.sflag [#allocation4], 1
    %2133 = vsyncpa %s2132, 1

</llo_original>
